<compile_context>
chip_gen: v5e
topology: v5e:2x2
jax: 0.10.0
libtpu: 0.0.40
codegen_flags: <defaults>
</compile_context>

<pallas_src>
import functools

import jax
import jax.numpy as jnp
from jax.experimental import pallas as pl
from jax.experimental.pallas import tpu as pltpu

W_TEMPORAL = 0.1   # module hard-codes w_temporal = 0.1
W_SPATIO = 0.1     # module hard-codes w_spatio  = 0.1
_MAX_ROWS_PER_BLOCK = 128


def _round_up(x, m):
    return ((x + m - 1) // m) * m


# ----------------------- in-kernel math helpers -----------------------------
def _softmax_ce(x, onehot, mask_b, mask_f, approx_out):
    """Masked softmax(x) and per-row CrossEntropy(x, onehot).

    Only the softmax output goes through the (optional) approximate
    reciprocal; the CE term uses log(z) + max, so the loss path is exact.
    """
    xm = jnp.where(mask_b, x, -1e30)
    mx = jnp.max(xm, axis=1, keepdims=True)
    e = jnp.exp(xm - mx) * mask_f                 # exact zeros on padded lanes
    z = jnp.sum(e, axis=1, keepdims=True)
    if approx_out:
        probs = e * pl.reciprocal(z, approx=True)  # EUP vrcp (outputs only)
    else:
        probs = e / z
    ce_row = (jnp.log(z) + mx) - jnp.sum(x * onehot, axis=1, keepdims=True)
    return probs, ce_row                           # (TB, CP), (TB, 1)


def _sigmoid_bce(x, y, mask_f, approx_out):
    """sigmoid(x) and per-row-summed BCEWithLogits(x, y), sharing one exp."""
    e = jnp.exp(-jnp.abs(x))
    denom = 1.0 + e
    if approx_out:
        r = pl.reciprocal(denom, approx=True)      # EUP vrcp (outputs only)
    else:
        r = 1.0 / denom
    sig = jnp.where(x >= 0, r, e * r)
    # log(1+e) with e in (0, 1]: abs error vs log1p < 1e-7 per element --
    # negligible for the mean loss at f32 (and avoids relying on a log1p
    # lowering inside Mosaic).
    per = (jnp.maximum(x, 0.0) - x * y + jnp.log(denom)) * mask_f
    bce_row = jnp.sum(per, axis=1, keepdims=True)  # (TB, 1)
    return sig, bce_row


# ------------------------------- the kernel ---------------------------------
def _make_kernel(TB, true_b, NS, NO, NV, CP, OUT_W, has_messages):
    ws = float(W_SPATIO)
    wt = float(W_TEMPORAL)
    inv_b = 1.0 / float(true_b)
    inv_bno = 1.0 / float(true_b * NO)
    inv_bnv = 1.0 / float(true_b * NV)

    def kernel(vec_ref, mat_ref, out_ref):
        vec = vec_ref[...]            # (TB, n_vec*CP)     dense load
        mat = mat_ref[...]            # (TB, CP, n_mat*CP) dense load

        def vseg(k):                  # (TB, CP) value slice at lane offset k*CP
            return vec[:, k * CP:(k + 1) * CP]

        def mseg(k):                  # (TB, CP, CP) value slice
            return mat[:, :, k * CP:(k + 1) * CP]

        s, o, v = vseg(0), vseg(1), vseg(2)
        s_onehot, o_tgt, v_tgt = vseg(3), vseg(4), vseg(5)

        lane = jax.lax.broadcasted_iota(jnp.int32, (1, CP), 1)
        mb_s, mb_o, mb_v = lane < NS, lane < NO, lane < NV
        mf_s = mb_s.astype(jnp.float32)
        mf_o = mb_o.astype(jnp.float32)
        mf_v = mb_v.astype(jnp.float32)

        # first-half losses + activations (exact division: feeds the loss path)
        _qs, ce_s1 = _softmax_ce(s, s_onehot, mb_s, mf_s, approx_out=False)
        _qo, bce_o1 = _sigmoid_bce(o, o_tgt, mf_o, approx_out=False)
        _qv, bce_v1 = _sigmoid_bce(v, v_tgt, mf_v, approx_out=False)

        # --- contractions at padded CP width; weights folded into the vectors.
        # "_a" vectors sit on the sublane axis (vec @ mat : reduce over rows),
        # "_b" vectors sit on the lane axis    (mat @ vec : reduce over cols).
        # Padded rows/cols of every matrix are zero, so padded vector lanes
        # (e.g. sigmoid(0)=0.5) never contribute.
        qs_w, qo_w, qv_w = _qs * ws, _qo * ws, _qv * ws
        qs_a, qo_a, qv_a = qs_w[:, :, None], qo_w[:, :, None], qv_w[:, :, None]
        qs_b, qo_b, qv_b = qs_w[:, None, :], qo_w[:, None, :], qv_w[:, None, :]

        SO, OV, VS = 0, 1, 2
        acc_a_s = qv_a * mseg(VS)      # vm(_qv, vs)   -> s
        acc_b_s = mseg(SO) * qo_b      # mv(so, _qo)   -> s
        acc_a_o = qs_a * mseg(SO)      # vm(_qs, so)   -> o
        acc_b_o = mseg(OV) * qv_b      # mv(ov, _qv)   -> o
        acc_a_v = qo_a * mseg(OV)      # vm(_qo, ov)   -> v
        acc_b_v = mseg(VS) * qs_b      # mv(vs, _qs)   -> v

        if has_messages:
            smw, omw, vmw = vseg(6) * wt, vseg(7) * wt, vseg(8) * wt
            sfw, ofw, vfw = vseg(9) * wt, vseg(10) * wt, vseg(11) * wt
            sm_a, om_a, vm_a = smw[:, :, None], omw[:, :, None], vmw[:, :, None]
            sf_b, of_b, vf_b = sfw[:, None, :], ofw[:, None, :], vfw[:, None, :]
            SS, OO, VV = 3, 4, 5
            SOT, OVT, VST, OST, VOT, SVT = 6, 7, 8, 9, 10, 11
            acc_a_s += sm_a * mseg(SS) + om_a * mseg(OST) + vm_a * mseg(VST)
            acc_b_s += mseg(SS) * sf_b + mseg(SOT) * of_b + mseg(SVT) * vf_b
            acc_a_o += om_a * mseg(OO) + sm_a * mseg(SOT) + vm_a * mseg(VOT)
            acc_b_o += mseg(OO) * of_b + mseg(OVT) * vf_b + mseg(OST) * sf_b
            acc_a_v += vm_a * mseg(VV) + sm_a * mseg(SVT) + om_a * mseg(OVT)
            acc_b_v += mseg(VV) * vf_b + mseg(VST) * sf_b + mseg(VOT) * of_b

        # fused reductions: one per (output, reduce-axis) pair -> 6 total.
        qs_pre = s + jnp.sum(acc_a_s, axis=1) + jnp.sum(acc_b_s, axis=2)
        qo_pre = o + jnp.sum(acc_a_o, axis=1) + jnp.sum(acc_b_o, axis=2)
        qv_pre = v + jnp.sum(acc_a_v, axis=1) + jnp.sum(acc_b_v, axis=2)

        # second-half losses + returned activations (approx recip only here).
        qs_out, ce_s2 = _softmax_ce(qs_pre, s_onehot, mb_s, mf_s, approx_out=True)
        qo_out, bce_o2 = _sigmoid_bce(qo_pre, o_tgt, mf_o, approx_out=True)
        qv_out, bce_v2 = _sigmoid_bce(qv_pre, v_tgt, mf_v, approx_out=True)

        # per-row loss partial, already normalised; summed over rows on host.
        row_loss = ((ce_s1 + ce_s2) * inv_b
                    + (bce_o1 + bce_o2) * inv_bno
                    + (bce_v1 + bce_v2) * inv_bnv)         # (TB, 1)

        # single dense, lane-aligned store: [qs | qo | qv | row_loss ... pad].
        packed = jnp.concatenate(
            [qs_out, qo_out, qv_out,
             jnp.broadcast_to(row_loss, (TB, OUT_W - 3 * CP))], axis=1)
        out_ref[...] = packed

    return kernel


# ------------------------------- host packing -------------------------------
def _pad_cols(x, width):
    b, n = x.shape
    if n == width:
        return x
    return jnp.pad(x, ((0, 0), (0, width - n)))


def _pad_mat(m, rows, cols):
    b, r, c = m.shape
    if r == rows and c == cols:
        return m
    return jnp.pad(m, ((0, 0), (0, rows - r), (0, cols - c)))


@functools.partial(jax.jit, static_argnames=("has_messages",))
def _async_tf_criterion_impl(s, o, v, so, ov, vs, ss, oo, vv,
                             so_t, ov_t, vs_t, os_t, vo_t, sv_t,
                             s_onehot, o_target, v_target,
                             s_msg, o_msg, v_msg, s_fmsg, o_fmsg, v_fmsg,
                             has_messages):
    B, NS = s.shape
    NO = o.shape[1]
    NV = v.shape[1]
    CP = _round_up(max(NS, NO, NV), 8)
    OUT_W = max(128, _round_up(3 * CP + 1, 128))
    f32 = jnp.float32

    # Pack vectors/targets and matrices into two lane-dense slabs.  Temporal
    # operands are only packed when the MessagePassing storage is non-empty.
    vec_parts = [s, o, v, s_onehot, o_target, v_target]
    mat_parts = [so, ov, vs]
    if has_messages:
        vec_parts += [s_msg, o_msg, v_msg, s_fmsg, o_fmsg, v_fmsg]
        mat_parts += [ss, oo, vv, so_t, ov_t, vs_t, os_t, vo_t, sv_t]

    vec_slab = jnp.concatenate(
        [_pad_cols(x.astype(f32), CP) for x in vec_parts], axis=1)       # (B, n*CP)
    mat_slab = jnp.concatenate(
        [_pad_mat(m.astype(f32), CP, CP) for m in mat_parts], axis=2)    # (B, CP, n*CP)

    TB = min(_MAX_ROWS_PER_BLOCK, _round_up(B, 8))
    B_pad = _round_up(B, TB)
    if B_pad != B:
        vec_slab = jnp.pad(vec_slab, ((0, B_pad - B), (0, 0)))
        mat_slab = jnp.pad(mat_slab, ((0, B_pad - B), (0, 0), (0, 0)))

    VSEG = vec_slab.shape[1]
    MSEG = mat_slab.shape[2]

    out = pl.pallas_call(
        _make_kernel(TB, B, NS, NO, NV, CP, OUT_W, has_messages),
        out_shape=jax.ShapeDtypeStruct((B_pad, OUT_W), jnp.float32),
        grid=(B_pad // TB,),
        in_specs=[pl.BlockSpec((TB, VSEG), lambda i: (i, 0)),
                  pl.BlockSpec((TB, CP, MSEG), lambda i: (i, 0, 0))],
        out_specs=pl.BlockSpec((TB, OUT_W), lambda i: (i, 0)),
        compiler_params=pltpu.CompilerParams(
            dimension_semantics=("parallel",)),
    )(vec_slab, mat_slab)

    qs = out[:B, 0:NS]
    qo = out[:B, CP:CP + NO]
    qv = out[:B, 2 * CP:2 * CP + NV]
    loss = jnp.sum(out[:B, 3 * CP])
    return qs, qo, qv, loss


def async_tf_criterion(s, o, v, so, ov, vs, ss, oo, vv,
                       so_t, ov_t, vs_t, os_t, vo_t, sv_t,
                       s_target, o_target, v_target,
                       s_msg=None, o_msg=None, v_msg=None,
                       s_fmsg=None, o_fmsg=None, v_fmsg=None):
    """Forward pass of AsyncTFCriterion (synchronous=False path)."""
    B, NS = s.shape
    NO = o.shape[1]
    NV = v.shape[1]

    # glue: integer class target -> one-hot; multi-label targets -> float
    s_onehot = jax.nn.one_hot(s_target, NS, dtype=jnp.float32)
    o_target = o_target.astype(jnp.float32)
    v_target = v_target.astype(jnp.float32)

    has_messages = s_msg is not None
    if not has_messages:
        # Fresh MessagePassing storage: every retrieved past/future message is
        # zero -> the 18 temporal terms are compiled out and not even packed.
        z = jnp.zeros
        s_msg, s_fmsg = z((B, NS), jnp.float32), z((B, NS), jnp.float32)
        o_msg, o_fmsg = z((B, NO), jnp.float32), z((B, NO), jnp.float32)
        v_msg, v_fmsg = z((B, NV), jnp.float32), z((B, NV), jnp.float32)

    return _async_tf_criterion_impl(
        s, o, v, so, ov, vs, ss, oo, vv,
        so_t, ov_t, vs_t, os_t, vo_t, sv_t,
        s_onehot, o_target, v_target,
        s_msg, o_msg, v_msg, s_fmsg, o_fmsg, v_fmsg,
        has_messages=has_messages)


# ---------------------------- pure-JAX reference ----------------------------
def _reference(s, o, v, so, ov, vs, ss, oo, vv,
               so_t, ov_t, vs_t, os_t, vo_t, sv_t,
               s_target, o_target, v_target,
               s_msg, o_msg, v_msg, s_fmsg, o_fmsg, v_fmsg):
    wt, wsp = W_TEMPORAL, W_SPATIO
    _qs = jax.nn.softmax(s, axis=1)
    _qo = jax.nn.sigmoid(o)
    _qv = jax.nn.sigmoid(v)
    vm = lambda a, m: jnp.einsum("bn,bnm->bm", a, m)
    mv = lambda m, a: jnp.einsum("bnm,bm->bn", m, a)
    qs_pre = (s + vm(s_msg, ss) * wt + mv(ss, s_fmsg) * wt
              + vm(o_msg, os_t) * wt + mv(so_t, o_fmsg) * wt
              + vm(v_msg, vs_t) * wt + mv(sv_t, v_fmsg) * wt
              + mv(so, _qo) * wsp + vm(_qv, vs) * wsp)
    qo_pre = (o + vm(o_msg, oo) * wt + mv(oo, o_fmsg) * wt
              + vm(v_msg, vo_t) * wt + mv(ov_t, v_fmsg) * wt
              + vm(s_msg, so_t) * wt + mv(os_t, s_fmsg) * wt
              + vm(_qs, so) * wsp + mv(ov, _qv) * wsp)
    qv_pre = (v + vm(v_msg, vv) * wt + mv(vv, v_fmsg) * wt
              + vm(s_msg, sv_t) * wt + mv(vs_t, s_fmsg) * wt
              + vm(o_msg, ov_t) * wt + mv(vo_t, o_fmsg) * wt
              + mv(vs, _qs) * wsp + vm(_qo, ov) * wsp)

    def ce(logits, tgt):
        lse = jax.nn.logsumexp(logits, axis=1)
        picked = jnp.take_along_axis(logits, tgt[:, None], axis=1)[:, 0]
        return jnp.mean(lse - picked)

    def bce(x, y):
        return jnp.mean(jnp.maximum(x, 0.0) - x * y + jnp.log1p(jnp.exp(-jnp.abs(x))))

    loss = (ce(s, s_target) + ce(qs_pre, s_target)
            + bce(o, o_target) + bce(qo_pre, o_target)
            + bce(v, v_target) + bce(qv_pre, v_target))
    return (jax.nn.softmax(qs_pre, axis=1), jax.nn.sigmoid(qo_pre),
            jax.nn.sigmoid(qv_pre), loss)


# ---------------------------------- main -------------------------------------
if __name__ == "__main__":
    B, NS, NO, NV = 2, 8, 16, 12  # batch, s_class, o_class, v_class

    def make_inputs(key, batch, with_messages):
        ks = jax.random.split(key, 24)
        f = jnp.float32
        d = dict(
            s=jax.random.normal(ks[0], (batch, NS), f),
            o=jax.random.normal(ks[1], (batch, NO), f),
            v=jax.random.normal(ks[2], (batch, NV), f),
            so=jax.random.normal(ks[3], (batch, NS, NO), f) * 0.1,
            ov=jax.random.normal(ks[4], (batch, NO, NV), f) * 0.1,
            vs=jax.random.normal(ks[5], (batch, NV, NS), f) * 0.1,
            ss=jax.random.normal(ks[6], (batch, NS, NS), f) * 0.1,
            oo=jax.random.normal(ks[7], (batch, NO, NO), f) * 0.1,
            vv=jax.random.normal(ks[8], (batch, NV, NV), f) * 0.1,
            so_t=jax.random.normal(ks[9], (batch, NS, NO), f) * 0.1,
            ov_t=jax.random.normal(ks[10], (batch, NO, NV), f) * 0.1,
            vs_t=jax.random.normal(ks[11], (batch, NV, NS), f) * 0.1,
            os_t=jax.random.normal(ks[12], (batch, NO, NS), f) * 0.1,
            vo_t=jax.random.normal(ks[13], (batch, NV, NO), f) * 0.1,
            sv_t=jax.random.normal(ks[14], (batch, NS, NV), f) * 0.1,
            s_target=jax.random.randint(ks[15], (batch,), 0, NS, jnp.int32),
            o_target=(jax.random.uniform(ks[16], (batch, NO)) > 0.5).astype(f),
            v_target=(jax.random.uniform(ks[17], (batch, NV)) > 0.5).astype(f),
        )
        if with_messages:
            d.update(
                s_msg=jax.random.normal(ks[18], (batch, NS), f),
                o_msg=jax.random.normal(ks[19], (batch, NO), f),
                v_msg=jax.random.normal(ks[20], (batch, NV), f),
                s_fmsg=jax.random.normal(ks[21], (batch, NS), f),
                o_fmsg=jax.random.normal(ks[22], (batch, NO), f),
                v_fmsg=jax.random.normal(ks[23], (batch, NV), f),
            )
        return d

    k1, k2 = jax.random.split(jax.random.PRNGKey(0))

    # Returned activations use pl.reciprocal(approx=True) -> slightly looser
    # tolerance; all loss terms use exact division.
    OUT_TOL = dict(atol=5e-3, rtol=5e-3)
    LOSS_TOL = dict(atol=2e-3, rtol=2e-3)

    # --- test 1: fresh module (no stored messages), B=2 ---------------------
    inp1 = make_inputs(k1, B, with_messages=False)
    qs, qo, qv, loss = async_tf_criterion(**inp1)
    jax.block_until_ready((qs, qo, qv, loss))
    zero_msgs = dict(
        s_msg=jnp.zeros((B, NS), jnp.float32), o_msg=jnp.zeros((B, NO), jnp.float32),
        v_msg=jnp.zeros((B, NV), jnp.float32), s_fmsg=jnp.zeros((B, NS), jnp.float32),
        o_fmsg=jnp.zeros((B, NO), jnp.float32), v_fmsg=jnp.zeros((B, NV), jnp.float32))
    rqs, rqo, rqv, rloss = _reference(**inp1, **zero_msgs)
    assert jnp.allclose(qs, rqs, **OUT_TOL)
    assert jnp.allclose(qo, rqo, **OUT_TOL)
    assert jnp.allclose(qv, rqv, **OUT_TOL)
    assert jnp.allclose(loss, rloss, **LOSS_TOL)

    # --- test 2: fused frames (T*B = 16 rows) with non-zero messages --------
    inp2 = make_inputs(k2, 16, with_messages=True)
    qs2, qo2, qv2, loss2 = async_tf_criterion(**inp2)
    jax.block_until_ready((qs2, qo2, qv2, loss2))
    rqs2, rqo2, rqv2, rloss2 = _reference(**inp2)
    assert jnp.allclose(qs2, rqs2, **OUT_TOL)
    assert jnp.allclose(qo2, rqo2, **OUT_TOL)
    assert jnp.allclose(qv2, rqv2, **OUT_TOL)
    assert jnp.allclose(loss2, rloss2, **LOSS_TOL)

    print("KERNEL_OK")
</pallas_src>

<mosaic_0001>
module attributes {stable_mosaic.version = 11 : i64} {
  func.func @kernel(%arg0: i32, %arg1: memref<8x96xf32, #tpu.memory_space<vmem>>, %arg2: memref<8x16x48xf32, #tpu.memory_space<vmem>>, %arg3: memref<8x128xf32, #tpu.memory_space<vmem>>) attributes {dimension_semantics = [#tpu.dimension_semantics<parallel>], iteration_bounds = array<i64: 1>, scalar_prefetch = 0 : i64, scratch_operands = 0 : i64, tpu.core_type = #tpu.core_type<tc>, window_params = [{transform_indices = @transform_0, window_bounds = array<i64: 8, 96>}, {transform_indices = @transform_1, window_bounds = array<i64: 8, 16, 48>}, {transform_indices = @transform_2, window_bounds = array<i64: 8, 128>}]} {
    %c0 = arith.constant 0 : index
    %c0_0 = arith.constant 0 : index
    %0 = vector.load %arg1[%c0, %c0_0] : memref<8x96xf32, #tpu.memory_space<vmem>>, vector<8x96xf32>
    %c0_1 = arith.constant 0 : index
    %c0_2 = arith.constant 0 : index
    %c0_3 = arith.constant 0 : index
    %1 = vector.load %arg2[%c0_1, %c0_2, %c0_3] : memref<8x16x48xf32, #tpu.memory_space<vmem>>, vector<8x16x48xf32>
    %2 = vector.extract_strided_slice %0 {offsets = [0, 0], sizes = [8, 16], strides = [1, 1]} : vector<8x96xf32> to vector<8x16xf32>
    %3 = vector.extract_strided_slice %0 {offsets = [0, 16], sizes = [8, 16], strides = [1, 1]} : vector<8x96xf32> to vector<8x16xf32>
    %4 = vector.extract_strided_slice %0 {offsets = [0, 32], sizes = [8, 16], strides = [1, 1]} : vector<8x96xf32> to vector<8x16xf32>
    %5 = vector.extract_strided_slice %0 {offsets = [0, 48], sizes = [8, 16], strides = [1, 1]} : vector<8x96xf32> to vector<8x16xf32>
    %6 = vector.extract_strided_slice %0 {offsets = [0, 64], sizes = [8, 16], strides = [1, 1]} : vector<8x96xf32> to vector<8x16xf32>
    %7 = vector.extract_strided_slice %0 {offsets = [0, 80], sizes = [8, 16], strides = [1, 1]} : vector<8x96xf32> to vector<8x16xf32>
    %8 = tpu.iota {dimensions = array<i32: 1>} : vector<1x16xi32>
    %c8_i32 = arith.constant 8 : i32
    %9 = vector.broadcast %c8_i32 : i32 to vector<1x16xi32>
    %10 = arith.cmpi slt, %8, %9 : vector<1x16xi32>
    %c16_i32 = arith.constant 16 : i32
    %11 = vector.broadcast %c16_i32 : i32 to vector<1x16xi32>
    %12 = arith.cmpi slt, %8, %11 : vector<1x16xi32>
    %c12_i32 = arith.constant 12 : i32
    %13 = vector.broadcast %c12_i32 : i32 to vector<1x16xi32>
    %14 = arith.cmpi slt, %8, %13 : vector<1x16xi32>
    %15 = arith.extui %10 : vector<1x16xi1> to vector<1x16xi32>
    %16 = arith.sitofp %15 : vector<1x16xi32> to vector<1x16xf32>
    %17 = arith.extui %12 : vector<1x16xi1> to vector<1x16xi32>
    %18 = arith.sitofp %17 : vector<1x16xi32> to vector<1x16xf32>
    %19 = arith.extui %14 : vector<1x16xi1> to vector<1x16xi32>
    %20 = arith.sitofp %19 : vector<1x16xi32> to vector<1x16xf32>
    %cst = arith.constant -1.000000e+30 : f32
    %21 = vector.shape_cast %10 : vector<1x16xi1> to vector<1x16xi1>
    %22 = vector.broadcast %21 : vector<1x16xi1> to vector<8x16xi1>
    %23 = vector.broadcast %cst : f32 to vector<8x16xf32>
    %24 = arith.select %22, %2, %23 : vector<8x16xi1>, vector<8x16xf32>
    %cst_4 = arith.constant dense<0xFF800000> : vector<8xf32>
    %25 = vector.multi_reduction <maximumf>, %24, %cst_4 [1] : vector<8x16xf32> to vector<8xf32>
    %26 = vector.shape_cast %25 : vector<8xf32> to vector<8x1xf32>
    %27 = vector.broadcast %26 : vector<8x1xf32> to vector<8x16xf32>
    %28 = arith.subf %24, %27 : vector<8x16xf32>
    %29 = math.exp %28 : vector<8x16xf32>
    %30 = vector.broadcast %16 : vector<1x16xf32> to vector<8x16xf32>
    %31 = arith.mulf %29, %30 : vector<8x16xf32>
    %cst_5 = arith.constant dense<0.000000e+00> : vector<8xf32>
    %32 = vector.multi_reduction <add>, %31, %cst_5 [1] : vector<8x16xf32> to vector<8xf32>
    %33 = vector.shape_cast %32 : vector<8xf32> to vector<8x1xf32>
    %34 = vector.broadcast %33 : vector<8x1xf32> to vector<8x16xf32>
    %35 = arith.divf %31, %34 : vector<8x16xf32>
    %36 = math.log %33 : vector<8x1xf32>
    %37 = arith.addf %36, %26 : vector<8x1xf32>
    %38 = arith.mulf %2, %5 : vector<8x16xf32>
    %cst_6 = arith.constant dense<0.000000e+00> : vector<8xf32>
    %39 = vector.multi_reduction <add>, %38, %cst_6 [1] : vector<8x16xf32> to vector<8xf32>
    %40 = vector.shape_cast %39 : vector<8xf32> to vector<8x1xf32>
    %41 = arith.subf %37, %40 : vector<8x1xf32>
    %42 = math.absf %3 : vector<8x16xf32>
    %cst_7 = arith.constant 0.000000e+00 : f32
    %43 = vector.broadcast %cst_7 : f32 to vector<8x16xf32>
    %44 = arith.subf %43, %42 : vector<8x16xf32>
    %45 = math.exp %44 : vector<8x16xf32>
    %cst_8 = arith.constant 1.000000e+00 : f32
    %46 = vector.broadcast %cst_8 : f32 to vector<8x16xf32>
    %47 = arith.addf %46, %45 : vector<8x16xf32>
    %cst_9 = arith.constant 1.000000e+00 : f32
    %48 = vector.broadcast %cst_9 : f32 to vector<8x16xf32>
    %49 = arith.divf %48, %47 : vector<8x16xf32>
    %cst_10 = arith.constant 0.000000e+00 : f32
    %50 = vector.broadcast %cst_10 : f32 to vector<8x16xf32>
    %51 = arith.cmpf oge, %3, %50 : vector<8x16xf32>
    %52 = arith.mulf %45, %49 : vector<8x16xf32>
    %53 = arith.select %51, %49, %52 : vector<8x16xi1>, vector<8x16xf32>
    %cst_11 = arith.constant 0.000000e+00 : f32
    %54 = vector.broadcast %cst_11 : f32 to vector<8x16xf32>
    %55 = arith.maximumf %3, %54 : vector<8x16xf32>
    %56 = arith.mulf %3, %6 : vector<8x16xf32>
    %57 = arith.subf %55, %56 : vector<8x16xf32>
    %58 = math.log %47 : vector<8x16xf32>
    %59 = arith.addf %57, %58 : vector<8x16xf32>
    %60 = vector.broadcast %18 : vector<1x16xf32> to vector<8x16xf32>
    %61 = arith.mulf %59, %60 : vector<8x16xf32>
    %cst_12 = arith.constant dense<0.000000e+00> : vector<8xf32>
    %62 = vector.multi_reduction <add>, %61, %cst_12 [1] : vector<8x16xf32> to vector<8xf32>
    %63 = vector.shape_cast %62 : vector<8xf32> to vector<8x1xf32>
    %64 = math.absf %4 : vector<8x16xf32>
    %cst_13 = arith.constant 0.000000e+00 : f32
    %65 = vector.broadcast %cst_13 : f32 to vector<8x16xf32>
    %66 = arith.subf %65, %64 : vector<8x16xf32>
    %67 = math.exp %66 : vector<8x16xf32>
    %cst_14 = arith.constant 1.000000e+00 : f32
    %68 = vector.broadcast %cst_14 : f32 to vector<8x16xf32>
    %69 = arith.addf %68, %67 : vector<8x16xf32>
    %cst_15 = arith.constant 1.000000e+00 : f32
    %70 = vector.broadcast %cst_15 : f32 to vector<8x16xf32>
    %71 = arith.divf %70, %69 : vector<8x16xf32>
    %cst_16 = arith.constant 0.000000e+00 : f32
    %72 = vector.broadcast %cst_16 : f32 to vector<8x16xf32>
    %73 = arith.cmpf oge, %4, %72 : vector<8x16xf32>
    %74 = arith.mulf %67, %71 : vector<8x16xf32>
    %75 = arith.select %73, %71, %74 : vector<8x16xi1>, vector<8x16xf32>
    %cst_17 = arith.constant 0.000000e+00 : f32
    %76 = vector.broadcast %cst_17 : f32 to vector<8x16xf32>
    %77 = arith.maximumf %4, %76 : vector<8x16xf32>
    %78 = arith.mulf %4, %7 : vector<8x16xf32>
    %79 = arith.subf %77, %78 : vector<8x16xf32>
    %80 = math.log %69 : vector<8x16xf32>
    %81 = arith.addf %79, %80 : vector<8x16xf32>
    %82 = vector.broadcast %20 : vector<1x16xf32> to vector<8x16xf32>
    %83 = arith.mulf %81, %82 : vector<8x16xf32>
    %cst_18 = arith.constant dense<0.000000e+00> : vector<8xf32>
    %84 = vector.multi_reduction <add>, %83, %cst_18 [1] : vector<8x16xf32> to vector<8xf32>
    %85 = vector.shape_cast %84 : vector<8xf32> to vector<8x1xf32>
    %cst_19 = arith.constant 1.000000e-01 : f32
    %86 = vector.broadcast %cst_19 : f32 to vector<8x16xf32>
    %87 = arith.mulf %35, %86 : vector<8x16xf32>
    %cst_20 = arith.constant 1.000000e-01 : f32
    %88 = vector.broadcast %cst_20 : f32 to vector<8x16xf32>
    %89 = arith.mulf %53, %88 : vector<8x16xf32>
    %cst_21 = arith.constant 1.000000e-01 : f32
    %90 = vector.broadcast %cst_21 : f32 to vector<8x16xf32>
    %91 = arith.mulf %75, %90 : vector<8x16xf32>
    %92 = vector.shape_cast %87 : vector<8x16xf32> to vector<8x16x1xf32>
    %93 = vector.shape_cast %89 : vector<8x16xf32> to vector<8x16x1xf32>
    %94 = vector.shape_cast %91 : vector<8x16xf32> to vector<8x16x1xf32>
    %95 = vector.shape_cast %87 : vector<8x16xf32> to vector<8x1x16xf32>
    %96 = vector.shape_cast %89 : vector<8x16xf32> to vector<8x1x16xf32>
    %97 = vector.shape_cast %91 : vector<8x16xf32> to vector<8x1x16xf32>
    %98 = vector.extract_strided_slice %1 {offsets = [0, 0, 32], sizes = [8, 16, 16], strides = [1, 1, 1]} : vector<8x16x48xf32> to vector<8x16x16xf32>
    %99 = vector.broadcast %94 : vector<8x16x1xf32> to vector<8x16x16xf32>
    %100 = arith.mulf %99, %98 : vector<8x16x16xf32>
    %101 = vector.extract_strided_slice %1 {offsets = [0, 0, 0], sizes = [8, 16, 16], strides = [1, 1, 1]} : vector<8x16x48xf32> to vector<8x16x16xf32>
    %102 = vector.broadcast %96 : vector<8x1x16xf32> to vector<8x16x16xf32>
    %103 = arith.mulf %101, %102 : vector<8x16x16xf32>
    %104 = vector.extract_strided_slice %1 {offsets = [0, 0, 0], sizes = [8, 16, 16], strides = [1, 1, 1]} : vector<8x16x48xf32> to vector<8x16x16xf32>
    %105 = vector.broadcast %92 : vector<8x16x1xf32> to vector<8x16x16xf32>
    %106 = arith.mulf %105, %104 : vector<8x16x16xf32>
    %107 = vector.extract_strided_slice %1 {offsets = [0, 0, 16], sizes = [8, 16, 16], strides = [1, 1, 1]} : vector<8x16x48xf32> to vector<8x16x16xf32>
    %108 = vector.broadcast %97 : vector<8x1x16xf32> to vector<8x16x16xf32>
    %109 = arith.mulf %107, %108 : vector<8x16x16xf32>
    %110 = vector.extract_strided_slice %1 {offsets = [0, 0, 16], sizes = [8, 16, 16], strides = [1, 1, 1]} : vector<8x16x48xf32> to vector<8x16x16xf32>
    %111 = vector.broadcast %93 : vector<8x16x1xf32> to vector<8x16x16xf32>
    %112 = arith.mulf %111, %110 : vector<8x16x16xf32>
    %113 = vector.extract_strided_slice %1 {offsets = [0, 0, 32], sizes = [8, 16, 16], strides = [1, 1, 1]} : vector<8x16x48xf32> to vector<8x16x16xf32>
    %114 = vector.broadcast %95 : vector<8x1x16xf32> to vector<8x16x16xf32>
    %115 = arith.mulf %113, %114 : vector<8x16x16xf32>
    %cst_22 = arith.constant dense<0.000000e+00> : vector<8x16xf32>
    %116 = vector.multi_reduction <add>, %100, %cst_22 [1] : vector<8x16x16xf32> to vector<8x16xf32>
    %117 = arith.addf %2, %116 : vector<8x16xf32>
    %cst_23 = arith.constant dense<0.000000e+00> : vector<8x16xf32>
    %118 = vector.multi_reduction <add>, %103, %cst_23 [2] : vector<8x16x16xf32> to vector<8x16xf32>
    %119 = arith.addf %117, %118 : vector<8x16xf32>
    %cst_24 = arith.constant dense<0.000000e+00> : vector<8x16xf32>
    %120 = vector.multi_reduction <add>, %106, %cst_24 [1] : vector<8x16x16xf32> to vector<8x16xf32>
    %121 = arith.addf %3, %120 : vector<8x16xf32>
    %cst_25 = arith.constant dense<0.000000e+00> : vector<8x16xf32>
    %122 = vector.multi_reduction <add>, %109, %cst_25 [2] : vector<8x16x16xf32> to vector<8x16xf32>
    %123 = arith.addf %121, %122 : vector<8x16xf32>
    %cst_26 = arith.constant dense<0.000000e+00> : vector<8x16xf32>
    %124 = vector.multi_reduction <add>, %112, %cst_26 [1] : vector<8x16x16xf32> to vector<8x16xf32>
    %125 = arith.addf %4, %124 : vector<8x16xf32>
    %cst_27 = arith.constant dense<0.000000e+00> : vector<8x16xf32>
    %126 = vector.multi_reduction <add>, %115, %cst_27 [2] : vector<8x16x16xf32> to vector<8x16xf32>
    %127 = arith.addf %125, %126 : vector<8x16xf32>
    %cst_28 = arith.constant -1.000000e+30 : f32
    %128 = vector.shape_cast %10 : vector<1x16xi1> to vector<1x16xi1>
    %129 = vector.broadcast %128 : vector<1x16xi1> to vector<8x16xi1>
    %130 = vector.broadcast %cst_28 : f32 to vector<8x16xf32>
    %131 = arith.select %129, %119, %130 : vector<8x16xi1>, vector<8x16xf32>
    %cst_29 = arith.constant dense<0xFF800000> : vector<8xf32>
    %132 = vector.multi_reduction <maximumf>, %131, %cst_29 [1] : vector<8x16xf32> to vector<8xf32>
    %133 = vector.shape_cast %132 : vector<8xf32> to vector<8x1xf32>
    %134 = vector.broadcast %133 : vector<8x1xf32> to vector<8x16xf32>
    %135 = arith.subf %131, %134 : vector<8x16xf32>
    %136 = math.exp %135 : vector<8x16xf32>
    %137 = vector.broadcast %16 : vector<1x16xf32> to vector<8x16xf32>
    %138 = arith.mulf %136, %137 : vector<8x16xf32>
    %cst_30 = arith.constant dense<0.000000e+00> : vector<8xf32>
    %139 = vector.multi_reduction <add>, %138, %cst_30 [1] : vector<8x16xf32> to vector<8xf32>
    %140 = vector.shape_cast %139 : vector<8xf32> to vector<8x1xf32>
    %141 = tpu.reciprocal %140 {approx = true} : vector<8x1xf32> -> vector<8x1xf32>
    %142 = vector.broadcast %141 : vector<8x1xf32> to vector<8x16xf32>
    %143 = arith.mulf %138, %142 : vector<8x16xf32>
    %144 = math.log %140 : vector<8x1xf32>
    %145 = arith.addf %144, %133 : vector<8x1xf32>
    %146 = arith.mulf %119, %5 : vector<8x16xf32>
    %cst_31 = arith.constant dense<0.000000e+00> : vector<8xf32>
    %147 = vector.multi_reduction <add>, %146, %cst_31 [1] : vector<8x16xf32> to vector<8xf32>
    %148 = vector.shape_cast %147 : vector<8xf32> to vector<8x1xf32>
    %149 = arith.subf %145, %148 : vector<8x1xf32>
    %150 = math.absf %123 : vector<8x16xf32>
    %cst_32 = arith.constant 0.000000e+00 : f32
    %151 = vector.broadcast %cst_32 : f32 to vector<8x16xf32>
    %152 = arith.subf %151, %150 : vector<8x16xf32>
    %153 = math.exp %152 : vector<8x16xf32>
    %cst_33 = arith.constant 1.000000e+00 : f32
    %154 = vector.broadcast %cst_33 : f32 to vector<8x16xf32>
    %155 = arith.addf %154, %153 : vector<8x16xf32>
    %156 = tpu.reciprocal %155 {approx = true} : vector<8x16xf32> -> vector<8x16xf32>
    %cst_34 = arith.constant 0.000000e+00 : f32
    %157 = vector.broadcast %cst_34 : f32 to vector<8x16xf32>
    %158 = arith.cmpf oge, %123, %157 : vector<8x16xf32>
    %159 = arith.mulf %153, %156 : vector<8x16xf32>
    %160 = arith.select %158, %156, %159 : vector<8x16xi1>, vector<8x16xf32>
    %cst_35 = arith.constant 0.000000e+00 : f32
    %161 = vector.broadcast %cst_35 : f32 to vector<8x16xf32>
    %162 = arith.maximumf %123, %161 : vector<8x16xf32>
    %163 = arith.mulf %123, %6 : vector<8x16xf32>
    %164 = arith.subf %162, %163 : vector<8x16xf32>
    %165 = math.log %155 : vector<8x16xf32>
    %166 = arith.addf %164, %165 : vector<8x16xf32>
    %167 = vector.broadcast %18 : vector<1x16xf32> to vector<8x16xf32>
    %168 = arith.mulf %166, %167 : vector<8x16xf32>
    %cst_36 = arith.constant dense<0.000000e+00> : vector<8xf32>
    %169 = vector.multi_reduction <add>, %168, %cst_36 [1] : vector<8x16xf32> to vector<8xf32>
    %170 = vector.shape_cast %169 : vector<8xf32> to vector<8x1xf32>
    %171 = math.absf %127 : vector<8x16xf32>
    %cst_37 = arith.constant 0.000000e+00 : f32
    %172 = vector.broadcast %cst_37 : f32 to vector<8x16xf32>
    %173 = arith.subf %172, %171 : vector<8x16xf32>
    %174 = math.exp %173 : vector<8x16xf32>
    %cst_38 = arith.constant 1.000000e+00 : f32
    %175 = vector.broadcast %cst_38 : f32 to vector<8x16xf32>
    %176 = arith.addf %175, %174 : vector<8x16xf32>
    %177 = tpu.reciprocal %176 {approx = true} : vector<8x16xf32> -> vector<8x16xf32>
    %cst_39 = arith.constant 0.000000e+00 : f32
    %178 = vector.broadcast %cst_39 : f32 to vector<8x16xf32>
    %179 = arith.cmpf oge, %127, %178 : vector<8x16xf32>
    %180 = arith.mulf %174, %177 : vector<8x16xf32>
    %181 = arith.select %179, %177, %180 : vector<8x16xi1>, vector<8x16xf32>
    %cst_40 = arith.constant 0.000000e+00 : f32
    %182 = vector.broadcast %cst_40 : f32 to vector<8x16xf32>
    %183 = arith.maximumf %127, %182 : vector<8x16xf32>
    %184 = arith.mulf %127, %7 : vector<8x16xf32>
    %185 = arith.subf %183, %184 : vector<8x16xf32>
    %186 = math.log %176 : vector<8x16xf32>
    %187 = arith.addf %185, %186 : vector<8x16xf32>
    %188 = vector.broadcast %20 : vector<1x16xf32> to vector<8x16xf32>
    %189 = arith.mulf %187, %188 : vector<8x16xf32>
    %cst_41 = arith.constant dense<0.000000e+00> : vector<8xf32>
    %190 = vector.multi_reduction <add>, %189, %cst_41 [1] : vector<8x16xf32> to vector<8xf32>
    %191 = vector.shape_cast %190 : vector<8xf32> to vector<8x1xf32>
    %192 = arith.addf %41, %149 : vector<8x1xf32>
    %cst_42 = arith.constant 5.000000e-01 : f32
    %193 = vector.broadcast %cst_42 : f32 to vector<8x1xf32>
    %194 = arith.mulf %192, %193 : vector<8x1xf32>
    %195 = arith.addf %63, %170 : vector<8x1xf32>
    %cst_43 = arith.constant 3.125000e-02 : f32
    %196 = vector.broadcast %cst_43 : f32 to vector<8x1xf32>
    %197 = arith.mulf %195, %196 : vector<8x1xf32>
    %198 = arith.addf %194, %197 : vector<8x1xf32>
    %199 = arith.addf %85, %191 : vector<8x1xf32>
    %cst_44 = arith.constant 0.0416666679 : f32
    %200 = vector.broadcast %cst_44 : f32 to vector<8x1xf32>
    %201 = arith.mulf %199, %200 : vector<8x1xf32>
    %202 = arith.addf %198, %201 : vector<8x1xf32>
    %203 = vector.shape_cast %202 : vector<8x1xf32> to vector<8x1xf32>
    %204 = vector.broadcast %203 : vector<8x1xf32> to vector<8x80xf32>
    %205 = tpu.concatenate %143, %160, %181, %204 in 1 : vector<8x16xf32>, vector<8x16xf32>, vector<8x16xf32>, vector<8x80xf32> -> vector<8x128xf32>
    %c0_45 = arith.constant 0 : index
    %c0_46 = arith.constant 0 : index
    %206 = vector.load %arg3[%c0_45, %c0_46] : memref<8x128xf32, #tpu.memory_space<vmem>>, vector<8x128xf32>
    tpu.vector_store %arg3[%c0_45, %c0_46], %205 {strides = array<i32>} : memref<8x128xf32, #tpu.memory_space<vmem>>, vector<8x128xf32>,
    return
  }
  func.func @transform_0(%arg0: i32) -> (i32, i32) {
    %c0_i32 = arith.constant 0 : i32
    %c0_i32_0 = arith.constant 0 : i32
    return %arg0, %c0_i32 : i32, i32
  }
  func.func @transform_1(%arg0: i32) -> (i32, i32, i32) {
    %c0_i32 = arith.constant 0 : i32
    %c0_i32_0 = arith.constant 0 : i32
    %c0_i32_1 = arith.constant 0 : i32
    return %arg0, %c0_i32, %c0_i32_0 : i32, i32, i32
  }
  func.func @transform_2(%arg0: i32) -> (i32, i32) {
    %c0_i32 = arith.constant 0 : i32
    %c0_i32_0 = arith.constant 0 : i32
    return %arg0, %c0_i32 : i32, i32
  }
}

</mosaic_0001>

<llo_original>
// kernel: _async_tf_criterion_impl.1
$region0: #{_async_tf_criterion_impl.1}
  #allocation0 [shape = 'u32[]', space=smem, size = 0x4, offset = 0x4, fixed_abs, tag = 'smem constant byte address 0x4 - core index']
  #allocation1 [shape = 'u32[72,128]{1,0:T(1,128)}', space=vmem, size = 0x9000, scoped, tag = 'internal scratch']
  %s0 = inlined_call_operand.vmem [shape: f32[8,96], index: 0, kind: input, shape index: {}]
  %s1 = inlined_call_operand.vmem [shape: f32[8,16,48], index: 1, kind: input, shape index: {}]
  %s2 = inlined_call_operand.vmem [shape: f32[8,128], index: 2, kind: output, shape index: {}]
  %s3 = sld [smem:[#allocation0]]
  $region18: #{_async_tf_criterion_impl.1} parent=0
    _
  %s5 = ssub.s32 1, %s3
  %s6 = scalar_select 0, %s5, %s3
  // Predicated region
  $region2: #{_async_tf_criterion_impl.1} parent=0 // pred_check
    _
  $region3: #{_async_tf_criterion_impl.1} parent=0 // pred_check_branch
    %8 = sbr.rel (0) target = $region5
  $region4: #{_async_tf_criterion_impl.1} parent=0 // pred_region
    _
  $region5: #{_async_tf_criterion_impl.1} parent=0 // pred_fallthru
    _
  // Predicated region
  $region6: #{_async_tf_criterion_impl.1} parent=0 // pred_check
    _
  $region7: #{_async_tf_criterion_impl.1} parent=0 // pred_check_branch
    %10 = sbr.rel (0) target = $region9
  $region8: #{_async_tf_criterion_impl.1} parent=0 // pred_region
    _
  $region9: #{_async_tf_criterion_impl.1} parent=0 // pred_fallthru
    _
  %v11 = vld [vmem:[%s0] sm:$0xff]
  %v12 = vld [vmem:[%s1] sm:$0xff]
  %v13 = vld [vmem:[%s1 + $0x8] sm:$0xff]
  %v14 = vld [vmem:[%s1 + $0x10] sm:$0xff]
  %v15 = vld [vmem:[%s1 + $0x18] sm:$0xff]
  %v16 = vld [vmem:[%s1 + $0x20] sm:$0xff]
  %v17 = vld [vmem:[%s1 + $0x28] sm:$0xff]
  %v18 = vld [vmem:[%s1 + $0x30] sm:$0xff]
  %v19 = vld [vmem:[%s1 + $0x38] sm:$0xff]
  %v20 = vld [vmem:[%s1 + $0x40] sm:$0xff]
  %v21 = vld [vmem:[%s1 + $0x48] sm:$0xff]
  %v22 = vld [vmem:[%s1 + $0x50] sm:$0xff]
  %v23 = vld [vmem:[%s1 + $0x58] sm:$0xff]
  %v24 = vld [vmem:[%s1 + $0x60] sm:$0xff]
  %v25 = vld [vmem:[%s1 + $0x68] sm:$0xff]
  %v26 = vld [vmem:[%s1 + $0x70] sm:$0xff]
  %v27 = vld [vmem:[%s1 + $0x78] sm:$0xff]
  %v28 = vlaneseq
  %v29 = vand.u32 %v28, 127
  %vm30 = vcmp.lt.s32.totalorder %v29, 8
  %vm31 = vcmp.lt.s32.totalorder %v29, 16
  %vm32 = vcmp.lt.s32.totalorder %v29, 12
  %v33 = vsel %vm30, 1, 0
  %v34 = vcvt.s32.f32 %v33
  %v35 = vsel %vm31, 1, 0
  %v36 = vcvt.s32.f32 %v35
  %v37 = vsel %vm32, 1, 0
  %v38 = vcvt.s32.f32 %v37
  %vm39 = vcmp.eq.s32.totalorder %v33, 1
  %v40 = vsel %vm39, %v11, -1e+30
  %vm41 = vcmask 130048
  %v42 = vsel %vm41, %v40, -inf
  %43 = vmax.xlane.f32.xlu0 %v42
  %v44 = vpop.xlane.xlu0 %43
  %v45 = vsub.f32 %v40, %v44
  %v46 = vmul.f32 %v45, 1.442695
  %v47 = vpow.pop %v46
  %v48 = vmul.f32 %v47, %v34
  %v49 = vsel %vm41, %v48, 0.0
  %50 = vadd.xlane.f32.xlu0 %v49
  %v51 = vpop.xlane.xlu0 %50
  %v52 = vrcp.pop %v51
  %v53 = vmul.f32 %v51, %v52
  %v54 = vsub.f32 1.0, %v53
  %v55 = vmul.f32 %v52, %v54
  %v56 = vadd.f32 %v52, %v55
  %vm57 = vweird.f32 %v51
  %vm58 = vweird.f32 %v52
  %vm59 = vmor %vm57, %vm58
  %v60 = vsel %vm59, %v52, %v56
  %v61 = vand.u32 2147483647, %v51
  %vm62 = vcmp.eq.f32.partialorder %v61, 8.507059e+37
  %v63 = vand.u32 %v51, 2147483648
  %v64 = vor.u32 1.1754944e-38, %v63
  %v65 = vsel %vm62, %v64, %v60
  %v66 = vmul.f32 %v48, %v65
  %v67 = vlog2.pop %v51
  %v68 = vmul.f32 %v67, 0.6931472
  %v69 = vadd.f32 %v68, %v44
  %71 = vrot.lane.b32.xlu0 %v11, 80
  %v72 = vpop.permute.xlu0 %71
  %v74 = vmul.f32 %v11, %v72
  %v75 = vsel %vm41, %v74, 0.0
  %76 = vadd.xlane.f32.xlu0 %v75
  %v77 = vpop.xlane.xlu0 %76
  %v78 = vsub.f32 %v69, %v77
  %v79 = vand.u32 2147483647, %v11
  %v80 = vsub.f32 0.0, %v79
  %v81 = vmul.f32 %v80, 1.442695
  %v82 = vpow.pop %v81
  %v83 = vadd.f32 %v82, 1.0
  %v84 = vrcp.pop %v83
  %v85 = vmul.f32 %v83, %v84
  %v86 = vsub.f32 1.0, %v85
  %v87 = vmul.f32 %v84, %v86
  %v88 = vadd.f32 %v84, %v87
  %vm89 = vweird.f32 %v83
  %vm90 = vweird.f32 %v84
  %vm91 = vmor %vm89, %vm90
  %v92 = vsel %vm91, %v84, %v88
  %v93 = vand.u32 2147483647, %v83
  %vm94 = vcmp.eq.f32.partialorder %v93, 8.507059e+37
  %v95 = vand.u32 %v83, 2147483648
  %v96 = vor.u32 1.1754944e-38, %v95
  %v97 = vsel %vm94, %v96, %v92
  %v98 = vmul.f32 1.0, %v97
  %vm99 = vcmp.ge.f32.partialorder %v11, 0.0
  %v100 = vmul.f32 %v82, %v98
  %v101 = vsel %vm99, %v98, %v100
  %v102 = vmax.f32 %v11, 0.0
  %v103 = vsub.f32 %v102, %v74
  %v104 = vlog2.pop %v83
  %v105 = vmul.f32 %v104, 0.6931472
  %v106 = vadd.f32 %v103, %v105
  %108 = vrot.lane.b32.xlu0 %v36, 16
  %v109 = vpop.permute.xlu0 %108
  %v111 = vmul.f32 %v106, %v109
  %113 = vrot.lane.b32.xlu0 %v111, 112
  %v114 = vpop.permute.xlu0 %113
  %v116 = vsel %vm41, %v114, 0.0
  %117 = vadd.xlane.f32.xlu0 %v116
  %v118 = vpop.xlane.xlu0 %117
  %120 = vrot.lane.b32.xlu0 %v38, 32
  %v121 = vpop.permute.xlu0 %120
  %v123 = vmul.f32 %v106, %v121
  %125 = vrot.lane.b32.xlu0 %v123, 96
  %v126 = vpop.permute.xlu0 %125
  %v128 = vsel %vm41, %v126, 0.0
  %129 = vadd.xlane.f32.xlu0 %v128
  %v130 = vpop.xlane.xlu0 %129
  %v131 = vmul.f32 %v66, 0.1
  %v132 = vmul.f32 %v101, 0.1
  %v133 = vperm.slane %v131, 0
  %v134 = vlaneseq
  %v135 = vshrl.u32 %v134, 7
  %137 = vset.pattern.permute.xlu0 %v135
  %138 = vperm.xlu0 %137, %v133
  %v139 = vpop.permute.xlu0 %138
  %v140 = vlaneseq
  %v141 = vshrl.u32 %v140, 7
  %v142 = vadd.s32 %v141, 8
  %143 = vset.pattern.permute.xlu0 %v142
  %144 = vperm.xlu0 %143, %v133
  %v145 = vpop.permute.xlu0 %144
  %v146 = vperm.slane %v131, 1
  %v147 = vlaneseq
  %v148 = vshrl.u32 %v147, 7
  %150 = vset.pattern.permute.xlu0 %v148
  %151 = vperm.xlu0 %150, %v146
  %v152 = vpop.permute.xlu0 %151
  %v153 = vlaneseq
  %v154 = vshrl.u32 %v153, 7
  %v155 = vadd.s32 %v154, 8
  %156 = vset.pattern.permute.xlu0 %v155
  %157 = vperm.xlu0 %156, %v146
  %v158 = vpop.permute.xlu0 %157
  %v159 = vperm.slane %v131, 2
  %v160 = vlaneseq
  %v161 = vshrl.u32 %v160, 7
  %163 = vset.pattern.permute.xlu0 %v161
  %164 = vperm.xlu0 %163, %v159
  %v165 = vpop.permute.xlu0 %164
  %v166 = vlaneseq
  %v167 = vshrl.u32 %v166, 7
  %v168 = vadd.s32 %v167, 8
  %169 = vset.pattern.permute.xlu0 %v168
  %170 = vperm.xlu0 %169, %v159
  %v171 = vpop.permute.xlu0 %170
  %v172 = vperm.slane %v131, 3
  %v173 = vlaneseq
  %v174 = vshrl.u32 %v173, 7
  %176 = vset.pattern.permute.xlu0 %v174
  %177 = vperm.xlu0 %176, %v172
  %v178 = vpop.permute.xlu0 %177
  %v179 = vlaneseq
  %v180 = vshrl.u32 %v179, 7
  %v181 = vadd.s32 %v180, 8
  %182 = vset.pattern.permute.xlu0 %v181
  %183 = vperm.xlu0 %182, %v172
  %v184 = vpop.permute.xlu0 %183
  %v185 = vperm.slane %v131, 4
  %v186 = vlaneseq
  %v187 = vshrl.u32 %v186, 7
  %189 = vset.pattern.permute.xlu0 %v187
  %190 = vperm.xlu0 %189, %v185
  %v191 = vpop.permute.xlu0 %190
  %v192 = vlaneseq
  %v193 = vshrl.u32 %v192, 7
  %v194 = vadd.s32 %v193, 8
  %195 = vset.pattern.permute.xlu0 %v194
  %196 = vperm.xlu0 %195, %v185
  %v197 = vpop.permute.xlu0 %196
  %v198 = vperm.slane %v131, 5
  %v199 = vlaneseq
  %v200 = vshrl.u32 %v199, 7
  %202 = vset.pattern.permute.xlu0 %v200
  %203 = vperm.xlu0 %202, %v198
  %v204 = vpop.permute.xlu0 %203
  %v205 = vlaneseq
  %v206 = vshrl.u32 %v205, 7
  %v207 = vadd.s32 %v206, 8
  %208 = vset.pattern.permute.xlu0 %v207
  %209 = vperm.xlu0 %208, %v198
  %v210 = vpop.permute.xlu0 %209
  %v211 = vperm.slane %v131, 6
  %v212 = vlaneseq
  %v213 = vshrl.u32 %v212, 7
  %215 = vset.pattern.permute.xlu0 %v213
  %216 = vperm.xlu0 %215, %v211
  %v217 = vpop.permute.xlu0 %216
  %v218 = vlaneseq
  %v219 = vshrl.u32 %v218, 7
  %v220 = vadd.s32 %v219, 8
  %221 = vset.pattern.permute.xlu0 %v220
  %222 = vperm.xlu0 %221, %v211
  %v223 = vpop.permute.xlu0 %222
  %v224 = vperm.slane %v131, 7
  %v225 = vlaneseq
  %v226 = vshrl.u32 %v225, 7
  %228 = vset.pattern.permute.xlu0 %v226
  %229 = vperm.xlu0 %228, %v224
  %v230 = vpop.permute.xlu0 %229
  %v231 = vlaneseq
  %v232 = vshrl.u32 %v231, 7
  %v233 = vadd.s32 %v232, 8
  %234 = vset.pattern.permute.xlu0 %v233
  %235 = vperm.xlu0 %234, %v224
  %v236 = vpop.permute.xlu0 %235
  %v237 = vperm.slane %v132, 0
  %v238 = vlaneseq
  %v239 = vshrl.u32 %v238, 7
  %v240 = vadd.s32 %v239, 16
  %241 = vset.pattern.permute.xlu0 %v240
  %242 = vperm.xlu0 %241, %v237
  %v243 = vpop.permute.xlu0 %242
  %v244 = vlaneseq
  %v245 = vshrl.u32 %v244, 7
  %v246 = vadd.s32 %v245, 24
  %247 = vset.pattern.permute.xlu0 %v246
  %248 = vperm.xlu0 %247, %v237
  %v249 = vpop.permute.xlu0 %248
  %v250 = vperm.slane %v132, 1
  %v251 = vlaneseq
  %v252 = vshrl.u32 %v251, 7
  %v253 = vadd.s32 %v252, 16
  %254 = vset.pattern.permute.xlu0 %v253
  %255 = vperm.xlu0 %254, %v250
  %v256 = vpop.permute.xlu0 %255
  %v257 = vlaneseq
  %v258 = vshrl.u32 %v257, 7
  %v259 = vadd.s32 %v258, 24
  %260 = vset.pattern.permute.xlu0 %v259
  %261 = vperm.xlu0 %260, %v250
  %v262 = vpop.permute.xlu0 %261
  %v263 = vperm.slane %v132, 2
  %v264 = vlaneseq
  %v265 = vshrl.u32 %v264, 7
  %v266 = vadd.s32 %v265, 16
  %267 = vset.pattern.permute.xlu0 %v266
  %268 = vperm.xlu0 %267, %v263
  %v269 = vpop.permute.xlu0 %268
  %v270 = vlaneseq
  %v271 = vshrl.u32 %v270, 7
  %v272 = vadd.s32 %v271, 24
  %273 = vset.pattern.permute.xlu0 %v272
  %274 = vperm.xlu0 %273, %v263
  %v275 = vpop.permute.xlu0 %274
  %v276 = vperm.slane %v132, 3
  %v277 = vlaneseq
  %v278 = vshrl.u32 %v277, 7
  %v279 = vadd.s32 %v278, 16
  %280 = vset.pattern.permute.xlu0 %v279
  %281 = vperm.xlu0 %280, %v276
  %v282 = vpop.permute.xlu0 %281
  %v283 = vlaneseq
  %v284 = vshrl.u32 %v283, 7
  %v285 = vadd.s32 %v284, 24
  %286 = vset.pattern.permute.xlu0 %v285
  %287 = vperm.xlu0 %286, %v276
  %v288 = vpop.permute.xlu0 %287
  %v289 = vperm.slane %v132, 4
  %v290 = vlaneseq
  %v291 = vshrl.u32 %v290, 7
  %v292 = vadd.s32 %v291, 16
  %293 = vset.pattern.permute.xlu0 %v292
  %294 = vperm.xlu0 %293, %v289
  %v295 = vpop.permute.xlu0 %294
  %v296 = vlaneseq
  %v297 = vshrl.u32 %v296, 7
  %v298 = vadd.s32 %v297, 24
  %299 = vset.pattern.permute.xlu0 %v298
  %300 = vperm.xlu0 %299, %v289
  %v301 = vpop.permute.xlu0 %300
  %v302 = vperm.slane %v132, 5
  %v303 = vlaneseq
  %v304 = vshrl.u32 %v303, 7
  %v305 = vadd.s32 %v304, 16
  %306 = vset.pattern.permute.xlu0 %v305
  %307 = vperm.xlu0 %306, %v302
  %v308 = vpop.permute.xlu0 %307
  %v309 = vlaneseq
  %v310 = vshrl.u32 %v309, 7
  %v311 = vadd.s32 %v310, 24
  %312 = vset.pattern.permute.xlu0 %v311
  %313 = vperm.xlu0 %312, %v302
  %v314 = vpop.permute.xlu0 %313
  %v315 = vperm.slane %v132, 6
  %v316 = vlaneseq
  %v317 = vshrl.u32 %v316, 7
  %v318 = vadd.s32 %v317, 16
  %319 = vset.pattern.permute.xlu0 %v318
  %320 = vperm.xlu0 %319, %v315
  %v321 = vpop.permute.xlu0 %320
  %v322 = vlaneseq
  %v323 = vshrl.u32 %v322, 7
  %v324 = vadd.s32 %v323, 24
  %325 = vset.pattern.permute.xlu0 %v324
  %326 = vperm.xlu0 %325, %v315
  %v327 = vpop.permute.xlu0 %326
  %v328 = vperm.slane %v132, 7
  %v329 = vlaneseq
  %v330 = vshrl.u32 %v329, 7
  %v331 = vadd.s32 %v330, 16
  %332 = vset.pattern.permute.xlu0 %v331
  %333 = vperm.xlu0 %332, %v328
  %v334 = vpop.permute.xlu0 %333
  %v335 = vlaneseq
  %v336 = vshrl.u32 %v335, 7
  %v337 = vadd.s32 %v336, 24
  %338 = vset.pattern.permute.xlu0 %v337
  %339 = vperm.xlu0 %338, %v328
  %v340 = vpop.permute.xlu0 %339
  %v341 = vlaneseq
  %v342 = vshrl.u32 %v341, 7
  %v343 = vadd.s32 %v342, 32
  %344 = vset.pattern.permute.xlu0 %v343
  %345 = vperm.xlu0 %344, %v237
  %v346 = vpop.permute.xlu0 %345
  %v347 = vlaneseq
  %v348 = vshrl.u32 %v347, 7
  %v349 = vadd.s32 %v348, 40
  %350 = vset.pattern.permute.xlu0 %v349
  %351 = vperm.xlu0 %350, %v237
  %v352 = vpop.permute.xlu0 %351
  %v353 = vlaneseq
  %v354 = vshrl.u32 %v353, 7
  %v355 = vadd.s32 %v354, 32
  %356 = vset.pattern.permute.xlu0 %v355
  %357 = vperm.xlu0 %356, %v250
  %v358 = vpop.permute.xlu0 %357
  %v359 = vlaneseq
  %v360 = vshrl.u32 %v359, 7
  %v361 = vadd.s32 %v360, 40
  %362 = vset.pattern.permute.xlu0 %v361
  %363 = vperm.xlu0 %362, %v250
  %v364 = vpop.permute.xlu0 %363
  %v365 = vlaneseq
  %v366 = vshrl.u32 %v365, 7
  %v367 = vadd.s32 %v366, 32
  %368 = vset.pattern.permute.xlu0 %v367
  %369 = vperm.xlu0 %368, %v263
  %v370 = vpop.permute.xlu0 %369
  %v371 = vlaneseq
  %v372 = vshrl.u32 %v371, 7
  %v373 = vadd.s32 %v372, 40
  %374 = vset.pattern.permute.xlu0 %v373
  %375 = vperm.xlu0 %374, %v263
  %v376 = vpop.permute.xlu0 %375
  %v377 = vlaneseq
  %v378 = vshrl.u32 %v377, 7
  %v379 = vadd.s32 %v378, 32
  %380 = vset.pattern.permute.xlu0 %v379
  %381 = vperm.xlu0 %380, %v276
  %v382 = vpop.permute.xlu0 %381
  %v383 = vlaneseq
  %v384 = vshrl.u32 %v383, 7
  %v385 = vadd.s32 %v384, 40
  %386 = vset.pattern.permute.xlu0 %v385
  %387 = vperm.xlu0 %386, %v276
  %v388 = vpop.permute.xlu0 %387
  %v389 = vlaneseq
  %v390 = vshrl.u32 %v389, 7
  %v391 = vadd.s32 %v390, 32
  %392 = vset.pattern.permute.xlu0 %v391
  %393 = vperm.xlu0 %392, %v289
  %v394 = vpop.permute.xlu0 %393
  %v395 = vlaneseq
  %v396 = vshrl.u32 %v395, 7
  %v397 = vadd.s32 %v396, 40
  %398 = vset.pattern.permute.xlu0 %v397
  %399 = vperm.xlu0 %398, %v289
  %v400 = vpop.permute.xlu0 %399
  %v401 = vlaneseq
  %v402 = vshrl.u32 %v401, 7
  %v403 = vadd.s32 %v402, 32
  %404 = vset.pattern.permute.xlu0 %v403
  %405 = vperm.xlu0 %404, %v302
  %v406 = vpop.permute.xlu0 %405
  %v407 = vlaneseq
  %v408 = vshrl.u32 %v407, 7
  %v409 = vadd.s32 %v408, 40
  %410 = vset.pattern.permute.xlu0 %v409
  %411 = vperm.xlu0 %410, %v302
  %v412 = vpop.permute.xlu0 %411
  %v413 = vlaneseq
  %v414 = vshrl.u32 %v413, 7
  %v415 = vadd.s32 %v414, 32
  %416 = vset.pattern.permute.xlu0 %v415
  %417 = vperm.xlu0 %416, %v315
  %v418 = vpop.permute.xlu0 %417
  %v419 = vlaneseq
  %v420 = vshrl.u32 %v419, 7
  %v421 = vadd.s32 %v420, 40
  %422 = vset.pattern.permute.xlu0 %v421
  %423 = vperm.xlu0 %422, %v315
  %v424 = vpop.permute.xlu0 %423
  %v425 = vlaneseq
  %v426 = vshrl.u32 %v425, 7
  %v427 = vadd.s32 %v426, 32
  %428 = vset.pattern.permute.xlu0 %v427
  %429 = vperm.xlu0 %428, %v328
  %v430 = vpop.permute.xlu0 %429
  %v431 = vlaneseq
  %v432 = vshrl.u32 %v431, 7
  %v433 = vadd.s32 %v432, 40
  %434 = vset.pattern.permute.xlu0 %v433
  %435 = vperm.xlu0 %434, %v328
  %v436 = vpop.permute.xlu0 %435
  %v438 = vrot.slane %v131, 1
  %v439 = vrot.slane %v131, 2
  %v440 = vrot.slane %v131, 3
  %v441 = vrot.slane %v131, 4
  %v442 = vrot.slane %v131, 5
  %v443 = vrot.slane %v131, 6
  %v444 = vrot.slane %v131, 7
  %v446 = vrot.slane %v132, 1
  %v447 = vrot.slane %v132, 2
  %v448 = vrot.slane %v132, 3
  %v449 = vrot.slane %v132, 4
  %v450 = vrot.slane %v132, 5
  %v451 = vrot.slane %v132, 6
  %v452 = vrot.slane %v132, 7
  %v453 = vmul.f32 %v346, %v12
  %v454 = vmul.f32 %v352, %v13
  %v455 = vmul.f32 %v358, %v14
  %v456 = vmul.f32 %v364, %v15
  %v457 = vmul.f32 %v370, %v16
  %v458 = vmul.f32 %v376, %v17
  %v459 = vmul.f32 %v382, %v18
  %v460 = vmul.f32 %v388, %v19
  %v461 = vmul.f32 %v394, %v20
  %v462 = vmul.f32 %v400, %v21
  %v463 = vmul.f32 %v406, %v22
  %v464 = vmul.f32 %v412, %v23
  %v465 = vmul.f32 %v418, %v24
  %v466 = vmul.f32 %v424, %v25
  %v467 = vmul.f32 %v430, %v26
  %v468 = vmul.f32 %v436, %v27
  %v469 = vperm.slane %v132, 0
  %v470 = vperm.slane %v446, 0
  %v471 = vperm.slane %v447, 0
  %v472 = vperm.slane %v448, 0
  %v473 = vperm.slane %v449, 0
  %v474 = vperm.slane %v450, 0
  %v475 = vperm.slane %v451, 0
  %v476 = vperm.slane %v452, 0
  %477 = vrot.lane.b32.xlu0 %v469, 112
  %v478 = vpop.permute.xlu0 %477
  %479 = vrot.lane.b32.xlu0 %v470, 112
  %v480 = vpop.permute.xlu0 %479
  %481 = vrot.lane.b32.xlu0 %v471, 112
  %v482 = vpop.permute.xlu0 %481
  %483 = vrot.lane.b32.xlu0 %v472, 112
  %v484 = vpop.permute.xlu0 %483
  %485 = vrot.lane.b32.xlu0 %v473, 112
  %v486 = vpop.permute.xlu0 %485
  %487 = vrot.lane.b32.xlu0 %v474, 112
  %v488 = vpop.permute.xlu0 %487
  %489 = vrot.lane.b32.xlu0 %v475, 112
  %v490 = vpop.permute.xlu0 %489
  %491 = vrot.lane.b32.xlu0 %v476, 112
  %v492 = vpop.permute.xlu0 %491
  %v501 = vmul.f32 %v12, %v478
  %v502 = vmul.f32 %v13, %v478
  %v503 = vmul.f32 %v14, %v480
  %v504 = vmul.f32 %v15, %v480
  %v505 = vmul.f32 %v16, %v482
  %v506 = vmul.f32 %v17, %v482
  %v507 = vmul.f32 %v18, %v484
  %v508 = vmul.f32 %v19, %v484
  %v509 = vmul.f32 %v20, %v486
  %v510 = vmul.f32 %v21, %v486
  %v511 = vmul.f32 %v22, %v488
  %v512 = vmul.f32 %v23, %v488
  %v513 = vmul.f32 %v24, %v490
  %v514 = vmul.f32 %v25, %v490
  %v515 = vmul.f32 %v26, %v492
  %v516 = vmul.f32 %v27, %v492
  %v517 = vmul.f32 %v139, %v12
  %v518 = vmul.f32 %v145, %v13
  %v519 = vmul.f32 %v152, %v14
  %v520 = vmul.f32 %v158, %v15
  %v521 = vmul.f32 %v165, %v16
  %v522 = vmul.f32 %v171, %v17
  %v523 = vmul.f32 %v178, %v18
  %v524 = vmul.f32 %v184, %v19
  %v525 = vmul.f32 %v191, %v20
  %v526 = vmul.f32 %v197, %v21
  %v527 = vmul.f32 %v204, %v22
  %v528 = vmul.f32 %v210, %v23
  %v529 = vmul.f32 %v217, %v24
  %v530 = vmul.f32 %v223, %v25
  %v531 = vmul.f32 %v230, %v26
  %v532 = vmul.f32 %v236, %v27
  %v533 = vmul.f32 %v243, %v12
  %v534 = vmul.f32 %v249, %v13
  %v535 = vmul.f32 %v256, %v14
  %v536 = vmul.f32 %v262, %v15
  %v537 = vmul.f32 %v269, %v16
  %v538 = vmul.f32 %v275, %v17
  %v539 = vmul.f32 %v282, %v18
  %v540 = vmul.f32 %v288, %v19
  %v541 = vmul.f32 %v295, %v20
  %v542 = vmul.f32 %v301, %v21
  %v543 = vmul.f32 %v308, %v22
  %v544 = vmul.f32 %v314, %v23
  %v545 = vmul.f32 %v321, %v24
  %v546 = vmul.f32 %v327, %v25
  %v547 = vmul.f32 %v334, %v26
  %v548 = vmul.f32 %v340, %v27
  %v549 = vperm.slane %v131, 0
  %v550 = vperm.slane %v438, 0
  %v551 = vperm.slane %v439, 0
  %v552 = vperm.slane %v440, 0
  %v553 = vperm.slane %v441, 0
  %v554 = vperm.slane %v442, 0
  %v555 = vperm.slane %v443, 0
  %v556 = vperm.slane %v444, 0
  %557 = vrot.lane.b32.xlu0 %v549, 32
  %v558 = vpop.permute.xlu0 %557
  %559 = vrot.lane.b32.xlu0 %v550, 32
  %v560 = vpop.permute.xlu0 %559
  %561 = vrot.lane.b32.xlu0 %v551, 32
  %v562 = vpop.permute.xlu0 %561
  %563 = vrot.lane.b32.xlu0 %v552, 32
  %v564 = vpop.permute.xlu0 %563
  %565 = vrot.lane.b32.xlu0 %v553, 32
  %v566 = vpop.permute.xlu0 %565
  %567 = vrot.lane.b32.xlu0 %v554, 32
  %v568 = vpop.permute.xlu0 %567
  %569 = vrot.lane.b32.xlu0 %v555, 32
  %v570 = vpop.permute.xlu0 %569
  %571 = vrot.lane.b32.xlu0 %v556, 32
  %v572 = vpop.permute.xlu0 %571
  %v581 = vmul.f32 %v12, %v558
  %v582 = vmul.f32 %v13, %v558
  %v583 = vmul.f32 %v14, %v560
  %v584 = vmul.f32 %v15, %v560
  %v585 = vmul.f32 %v16, %v562
  %v586 = vmul.f32 %v17, %v562
  %v587 = vmul.f32 %v18, %v564
  %v588 = vmul.f32 %v19, %v564
  %v589 = vmul.f32 %v20, %v566
  %v590 = vmul.f32 %v21, %v566
  %v591 = vmul.f32 %v22, %v568
  %v592 = vmul.f32 %v23, %v568
  %v593 = vmul.f32 %v24, %v570
  %v594 = vmul.f32 %v25, %v570
  %v595 = vmul.f32 %v26, %v572
  %v596 = vmul.f32 %v27, %v572
  %vm597 = vcmask 392448
  %v598 = vsel %vm597, %v453, 0.0
  %v599 = vsel %vm597, %v454, 0.0
  %v600 = vadd.f32 %v598, %v599
  %v601 = vrot.slane %v600, 4
  %v602 = vadd.f32 %v600, %v601
  %v603 = vrot.slane %v602, 2
  %v604 = vadd.f32 %v602, %v603
  %v605 = vrot.slane %v604, 1
  %v606 = vadd.f32 %v604, %v605
  %v607 = vsel %vm597, %v455, 0.0
  %v608 = vsel %vm597, %v456, 0.0
  %v609 = vadd.f32 %v607, %v608
  %v610 = vrot.slane %v609, 4
  %v611 = vadd.f32 %v609, %v610
  %v612 = vrot.slane %v611, 2
  %v613 = vadd.f32 %v611, %v612
  %v614 = vrot.slane %v613, 1
  %v615 = vadd.f32 %v613, %v614
  %v616 = vsel %vm597, %v457, 0.0
  %v617 = vsel %vm597, %v458, 0.0
  %v618 = vadd.f32 %v616, %v617
  %v619 = vrot.slane %v618, 4
  %v620 = vadd.f32 %v618, %v619
  %v621 = vrot.slane %v620, 2
  %v622 = vadd.f32 %v620, %v621
  %v623 = vrot.slane %v622, 1
  %v624 = vadd.f32 %v622, %v623
  %v625 = vsel %vm597, %v459, 0.0
  %v626 = vsel %vm597, %v460, 0.0
  %v627 = vadd.f32 %v625, %v626
  %v628 = vrot.slane %v627, 4
  %v629 = vadd.f32 %v627, %v628
  %v630 = vrot.slane %v629, 2
  %v631 = vadd.f32 %v629, %v630
  %v632 = vrot.slane %v631, 1
  %v633 = vadd.f32 %v631, %v632
  %v634 = vsel %vm597, %v461, 0.0
  %v635 = vsel %vm597, %v462, 0.0
  %v636 = vadd.f32 %v634, %v635
  %v637 = vrot.slane %v636, 4
  %v638 = vadd.f32 %v636, %v637
  %v639 = vrot.slane %v638, 2
  %v640 = vadd.f32 %v638, %v639
  %v641 = vrot.slane %v640, 1
  %v642 = vadd.f32 %v640, %v641
  %v643 = vsel %vm597, %v463, 0.0
  %v644 = vsel %vm597, %v464, 0.0
  %v645 = vadd.f32 %v643, %v644
  %v646 = vrot.slane %v645, 4
  %v647 = vadd.f32 %v645, %v646
  %v648 = vrot.slane %v647, 2
  %v649 = vadd.f32 %v647, %v648
  %v650 = vrot.slane %v649, 1
  %v651 = vadd.f32 %v649, %v650
  %v652 = vsel %vm597, %v465, 0.0
  %v653 = vsel %vm597, %v466, 0.0
  %v654 = vadd.f32 %v652, %v653
  %v655 = vrot.slane %v654, 4
  %v656 = vadd.f32 %v654, %v655
  %v657 = vrot.slane %v656, 2
  %v658 = vadd.f32 %v656, %v657
  %v659 = vrot.slane %v658, 1
  %v660 = vadd.f32 %v658, %v659
  %v661 = vsel %vm597, %v467, 0.0
  %v662 = vsel %vm597, %v468, 0.0
  %v663 = vadd.f32 %v661, %v662
  %v664 = vrot.slane %v663, 4
  %v665 = vadd.f32 %v663, %v664
  %v666 = vrot.slane %v665, 2
  %v667 = vadd.f32 %v665, %v666
  %v668 = vrot.slane %v667, 1
  %v669 = vadd.f32 %v667, %v668
  %vm678 = vcmask 1041409
  %v679 = vsel %vm678, %v615, %v606
  %vm680 = vcmask 1042434
  %v681 = vsel %vm680, %v624, %v679
  %vm682 = vcmask 1043459
  %v683 = vsel %vm682, %v633, %v681
  %vm684 = vcmask 1044484
  %v685 = vsel %vm684, %v642, %v683
  %vm686 = vcmask 1045509
  %v687 = vsel %vm686, %v651, %v685
  %vm688 = vcmask 1046534
  %v689 = vsel %vm688, %v660, %v687
  %vm690 = vcmask 1047559
  %v691 = vsel %vm690, %v669, %v689
  %692 = vrot.lane.b32.xlu0 %v691, 96
  %v693 = vpop.permute.xlu0 %692
  %v695 = vadd.f32 %v11, %v693
  %v696 = vsel %vm41, %v501, 0.0
  %697 = vadd.xlane.f32.xlu0 %v696
  %v698 = vpop.xlane.xlu0 %697
  %v699 = vsel %vm41, %v502, 0.0
  %700 = vadd.xlane.f32.xlu0 %v699
  %v701 = vpop.xlane.xlu0 %700
  %v702 = vsel %vm41, %v503, 0.0
  %703 = vadd.xlane.f32.xlu0 %v702
  %v704 = vpop.xlane.xlu0 %703
  %v705 = vsel %vm41, %v504, 0.0
  %706 = vadd.xlane.f32.xlu0 %v705
  %v707 = vpop.xlane.xlu0 %706
  %v708 = vsel %vm41, %v505, 0.0
  %709 = vadd.xlane.f32.xlu0 %v708
  %v710 = vpop.xlane.xlu0 %709
  %v711 = vsel %vm41, %v506, 0.0
  %712 = vadd.xlane.f32.xlu0 %v711
  %v713 = vpop.xlane.xlu0 %712
  %v714 = vsel %vm41, %v507, 0.0
  %715 = vadd.xlane.f32.xlu0 %v714
  %v716 = vpop.xlane.xlu0 %715
  %v717 = vsel %vm41, %v508, 0.0
  %718 = vadd.xlane.f32.xlu0 %v717
  %v719 = vpop.xlane.xlu0 %718
  %v720 = vsel %vm41, %v509, 0.0
  %721 = vadd.xlane.f32.xlu0 %v720
  %v722 = vpop.xlane.xlu0 %721
  %v723 = vsel %vm41, %v510, 0.0
  %724 = vadd.xlane.f32.xlu0 %v723
  %v725 = vpop.xlane.xlu0 %724
  %v726 = vsel %vm41, %v511, 0.0
  %727 = vadd.xlane.f32.xlu0 %v726
  %v728 = vpop.xlane.xlu0 %727
  %v729 = vsel %vm41, %v512, 0.0
  %730 = vadd.xlane.f32.xlu0 %v729
  %v731 = vpop.xlane.xlu0 %730
  %v732 = vsel %vm41, %v513, 0.0
  %733 = vadd.xlane.f32.xlu0 %v732
  %v734 = vpop.xlane.xlu0 %733
  %v735 = vsel %vm41, %v514, 0.0
  %736 = vadd.xlane.f32.xlu0 %v735
  %v737 = vpop.xlane.xlu0 %736
  %v738 = vsel %vm41, %v515, 0.0
  %739 = vadd.xlane.f32.xlu0 %v738
  %v740 = vpop.xlane.xlu0 %739
  %v741 = vsel %vm41, %v516, 0.0
  %742 = vadd.xlane.f32.xlu0 %v741
  %v743 = vpop.xlane.xlu0 %742
  %v760 = vperm.slane %v698, %v29
  %v761 = vadd.s32 %v29, 4294967288
  %v762 = vperm.slane %v701, %v761
  %vm763 = vcmask 130112
  %v764 = vsel %vm763, %v762, %v760
  %v765 = vperm.slane %v704, %v29
  %v766 = vperm.slane %v707, %v761
  %v767 = vsel %vm763, %v766, %v765
  %v768 = vperm.slane %v710, %v29
  %v769 = vperm.slane %v713, %v761
  %v770 = vsel %vm763, %v769, %v768
  %v771 = vperm.slane %v716, %v29
  %v772 = vperm.slane %v719, %v761
  %v773 = vsel %vm763, %v772, %v771
  %v774 = vperm.slane %v722, %v29
  %v775 = vperm.slane %v725, %v761
  %v776 = vsel %vm763, %v775, %v774
  %v777 = vperm.slane %v728, %v29
  %v778 = vperm.slane %v731, %v761
  %v779 = vsel %vm763, %v778, %v777
  %v780 = vperm.slane %v734, %v29
  %v781 = vperm.slane %v737, %v761
  %v782 = vsel %vm763, %v781, %v780
  %v783 = vperm.slane %v740, %v29
  %v784 = vperm.slane %v743, %v761
  %v785 = vsel %vm763, %v784, %v783
  %v786 = vsel %vm678, %v767, %v764
  %v787 = vsel %vm680, %v770, %v786
  %v788 = vsel %vm682, %v773, %v787
  %v789 = vsel %vm684, %v776, %v788
  %v790 = vsel %vm686, %v779, %v789
  %v791 = vsel %vm688, %v782, %v790
  %v792 = vsel %vm690, %v785, %v791
  %v794 = vadd.f32 %v695, %v792
  %v795 = vsel %vm41, %v517, 0.0
  %v796 = vsel %vm41, %v518, 0.0
  %v797 = vadd.f32 %v795, %v796
  %v798 = vrot.slane %v797, 4
  %v799 = vadd.f32 %v797, %v798
  %v800 = vrot.slane %v799, 2
  %v801 = vadd.f32 %v799, %v800
  %v802 = vrot.slane %v801, 1
  %v803 = vadd.f32 %v801, %v802
  %v804 = vsel %vm41, %v519, 0.0
  %v805 = vsel %vm41, %v520, 0.0
  %v806 = vadd.f32 %v804, %v805
  %v807 = vrot.slane %v806, 4
  %v808 = vadd.f32 %v806, %v807
  %v809 = vrot.slane %v808, 2
  %v810 = vadd.f32 %v808, %v809
  %v811 = vrot.slane %v810, 1
  %v812 = vadd.f32 %v810, %v811
  %v813 = vsel %vm41, %v521, 0.0
  %v814 = vsel %vm41, %v522, 0.0
  %v815 = vadd.f32 %v813, %v814
  %v816 = vrot.slane %v815, 4
  %v817 = vadd.f32 %v815, %v816
  %v818 = vrot.slane %v817, 2
  %v819 = vadd.f32 %v817, %v818
  %v820 = vrot.slane %v819, 1
  %v821 = vadd.f32 %v819, %v820
  %v822 = vsel %vm41, %v523, 0.0
  %v823 = vsel %vm41, %v524, 0.0
  %v824 = vadd.f32 %v822, %v823
  %v825 = vrot.slane %v824, 4
  %v826 = vadd.f32 %v824, %v825
  %v827 = vrot.slane %v826, 2
  %v828 = vadd.f32 %v826, %v827
  %v829 = vrot.slane %v828, 1
  %v830 = vadd.f32 %v828, %v829
  %v831 = vsel %vm41, %v525, 0.0
  %v832 = vsel %vm41, %v526, 0.0
  %v833 = vadd.f32 %v831, %v832
  %v834 = vrot.slane %v833, 4
  %v835 = vadd.f32 %v833, %v834
  %v836 = vrot.slane %v835, 2
  %v837 = vadd.f32 %v835, %v836
  %v838 = vrot.slane %v837, 1
  %v839 = vadd.f32 %v837, %v838
  %v840 = vsel %vm41, %v527, 0.0
  %v841 = vsel %vm41, %v528, 0.0
  %v842 = vadd.f32 %v840, %v841
  %v843 = vrot.slane %v842, 4
  %v844 = vadd.f32 %v842, %v843
  %v845 = vrot.slane %v844, 2
  %v846 = vadd.f32 %v844, %v845
  %v847 = vrot.slane %v846, 1
  %v848 = vadd.f32 %v846, %v847
  %v849 = vsel %vm41, %v529, 0.0
  %v850 = vsel %vm41, %v530, 0.0
  %v851 = vadd.f32 %v849, %v850
  %v852 = vrot.slane %v851, 4
  %v853 = vadd.f32 %v851, %v852
  %v854 = vrot.slane %v853, 2
  %v855 = vadd.f32 %v853, %v854
  %v856 = vrot.slane %v855, 1
  %v857 = vadd.f32 %v855, %v856
  %v858 = vsel %vm41, %v531, 0.0
  %v859 = vsel %vm41, %v532, 0.0
  %v860 = vadd.f32 %v858, %v859
  %v861 = vrot.slane %v860, 4
  %v862 = vadd.f32 %v860, %v861
  %v863 = vrot.slane %v862, 2
  %v864 = vadd.f32 %v862, %v863
  %v865 = vrot.slane %v864, 1
  %v866 = vadd.f32 %v864, %v865
  %v875 = vsel %vm678, %v812, %v803
  %v876 = vsel %vm680, %v821, %v875
  %v877 = vsel %vm682, %v830, %v876
  %v878 = vsel %vm684, %v839, %v877
  %v879 = vsel %vm686, %v848, %v878
  %v880 = vsel %vm688, %v857, %v879
  %v881 = vsel %vm690, %v866, %v880
  %882 = vrot.lane.b32.xlu0 %v881, 16
  %v883 = vpop.permute.xlu0 %882
  %v885 = vadd.f32 %v11, %v883
  %902 = vrot.lane.b32.xlu0 %v501, 112
  %v903 = vpop.permute.xlu0 %902
  %904 = vrot.lane.b32.xlu0 %v502, 112
  %v905 = vpop.permute.xlu0 %904
  %906 = vrot.lane.b32.xlu0 %v503, 112
  %v907 = vpop.permute.xlu0 %906
  %908 = vrot.lane.b32.xlu0 %v504, 112
  %v909 = vpop.permute.xlu0 %908
  %910 = vrot.lane.b32.xlu0 %v505, 112
  %v911 = vpop.permute.xlu0 %910
  %912 = vrot.lane.b32.xlu0 %v506, 112
  %v913 = vpop.permute.xlu0 %912
  %914 = vrot.lane.b32.xlu0 %v507, 112
  %v915 = vpop.permute.xlu0 %914
  %916 = vrot.lane.b32.xlu0 %v508, 112
  %v917 = vpop.permute.xlu0 %916
  %918 = vrot.lane.b32.xlu0 %v509, 112
  %v919 = vpop.permute.xlu0 %918
  %920 = vrot.lane.b32.xlu0 %v510, 112
  %v921 = vpop.permute.xlu0 %920
  %922 = vrot.lane.b32.xlu0 %v511, 112
  %v923 = vpop.permute.xlu0 %922
  %924 = vrot.lane.b32.xlu0 %v512, 112
  %v925 = vpop.permute.xlu0 %924
  %926 = vrot.lane.b32.xlu0 %v513, 112
  %v927 = vpop.permute.xlu0 %926
  %928 = vrot.lane.b32.xlu0 %v514, 112
  %v929 = vpop.permute.xlu0 %928
  %930 = vrot.lane.b32.xlu0 %v515, 112
  %v931 = vpop.permute.xlu0 %930
  %932 = vrot.lane.b32.xlu0 %v516, 112
  %v933 = vpop.permute.xlu0 %932
  %v950 = vsel %vm41, %v903, 0.0
  %951 = vadd.xlane.f32.xlu0 %v950
  %v952 = vpop.xlane.xlu0 %951
  %v953 = vsel %vm41, %v905, 0.0
  %954 = vadd.xlane.f32.xlu0 %v953
  %v955 = vpop.xlane.xlu0 %954
  %v956 = vsel %vm41, %v907, 0.0
  %957 = vadd.xlane.f32.xlu0 %v956
  %v958 = vpop.xlane.xlu0 %957
  %v959 = vsel %vm41, %v909, 0.0
  %960 = vadd.xlane.f32.xlu0 %v959
  %v961 = vpop.xlane.xlu0 %960
  %v962 = vsel %vm41, %v911, 0.0
  %963 = vadd.xlane.f32.xlu0 %v962
  %v964 = vpop.xlane.xlu0 %963
  %v965 = vsel %vm41, %v913, 0.0
  %966 = vadd.xlane.f32.xlu0 %v965
  %v967 = vpop.xlane.xlu0 %966
  %v968 = vsel %vm41, %v915, 0.0
  %969 = vadd.xlane.f32.xlu0 %v968
  %v970 = vpop.xlane.xlu0 %969
  %v971 = vsel %vm41, %v917, 0.0
  %972 = vadd.xlane.f32.xlu0 %v971
  %v973 = vpop.xlane.xlu0 %972
  %v974 = vsel %vm41, %v919, 0.0
  %975 = vadd.xlane.f32.xlu0 %v974
  %v976 = vpop.xlane.xlu0 %975
  %v977 = vsel %vm41, %v921, 0.0
  %978 = vadd.xlane.f32.xlu0 %v977
  %v979 = vpop.xlane.xlu0 %978
  %v980 = vsel %vm41, %v923, 0.0
  %981 = vadd.xlane.f32.xlu0 %v980
  %v982 = vpop.xlane.xlu0 %981
  %v983 = vsel %vm41, %v925, 0.0
  %984 = vadd.xlane.f32.xlu0 %v983
  %v985 = vpop.xlane.xlu0 %984
  %v986 = vsel %vm41, %v927, 0.0
  %987 = vadd.xlane.f32.xlu0 %v986
  %v988 = vpop.xlane.xlu0 %987
  %v989 = vsel %vm41, %v929, 0.0
  %990 = vadd.xlane.f32.xlu0 %v989
  %v991 = vpop.xlane.xlu0 %990
  %v992 = vsel %vm41, %v931, 0.0
  %993 = vadd.xlane.f32.xlu0 %v992
  %v994 = vpop.xlane.xlu0 %993
  %v995 = vsel %vm41, %v933, 0.0
  %996 = vadd.xlane.f32.xlu0 %v995
  %v997 = vpop.xlane.xlu0 %996
  %v1014 = vadd.s32 %v29, 4294967280
  %v1015 = vperm.slane %v952, %v1014
  %v1016 = vadd.s32 %v29, 4294967272
  %v1017 = vperm.slane %v955, %v1016
  %vm1018 = vcmask 261312
  %v1019 = vsel %vm1018, %v1017, %v1015
  %v1020 = vperm.slane %v958, %v1014
  %v1021 = vperm.slane %v961, %v1016
  %v1022 = vsel %vm1018, %v1021, %v1020
  %v1023 = vperm.slane %v964, %v1014
  %v1024 = vperm.slane %v967, %v1016
  %v1025 = vsel %vm1018, %v1024, %v1023
  %v1026 = vperm.slane %v970, %v1014
  %v1027 = vperm.slane %v973, %v1016
  %v1028 = vsel %vm1018, %v1027, %v1026
  %v1029 = vperm.slane %v976, %v1014
  %v1030 = vperm.slane %v979, %v1016
  %v1031 = vsel %vm1018, %v1030, %v1029
  %v1032 = vperm.slane %v982, %v1014
  %v1033 = vperm.slane %v985, %v1016
  %v1034 = vsel %vm1018, %v1033, %v1032
  %v1035 = vperm.slane %v988, %v1014
  %v1036 = vperm.slane %v991, %v1016
  %v1037 = vsel %vm1018, %v1036, %v1035
  %v1038 = vperm.slane %v994, %v1014
  %v1039 = vperm.slane %v997, %v1016
  %v1040 = vsel %vm1018, %v1039, %v1038
  %v1041 = vsel %vm678, %v1022, %v1019
  %v1042 = vsel %vm680, %v1025, %v1041
  %v1043 = vsel %vm682, %v1028, %v1042
  %v1044 = vsel %vm684, %v1031, %v1043
  %v1045 = vsel %vm686, %v1034, %v1044
  %v1046 = vsel %vm688, %v1037, %v1045
  %v1047 = vsel %vm690, %v1040, %v1046
  %v1049 = vadd.f32 %v885, %v1047
  %vm1050 = vcmask 261248
  %v1051 = vsel %vm1050, %v533, 0.0
  %v1052 = vsel %vm1050, %v534, 0.0
  %v1053 = vadd.f32 %v1051, %v1052
  %v1054 = vrot.slane %v1053, 4
  %v1055 = vadd.f32 %v1053, %v1054
  %v1056 = vrot.slane %v1055, 2
  %v1057 = vadd.f32 %v1055, %v1056
  %v1058 = vrot.slane %v1057, 1
  %v1059 = vadd.f32 %v1057, %v1058
  %v1060 = vsel %vm1050, %v535, 0.0
  %v1061 = vsel %vm1050, %v536, 0.0
  %v1062 = vadd.f32 %v1060, %v1061
  %v1063 = vrot.slane %v1062, 4
  %v1064 = vadd.f32 %v1062, %v1063
  %v1065 = vrot.slane %v1064, 2
  %v1066 = vadd.f32 %v1064, %v1065
  %v1067 = vrot.slane %v1066, 1
  %v1068 = vadd.f32 %v1066, %v1067
  %v1069 = vsel %vm1050, %v537, 0.0
  %v1070 = vsel %vm1050, %v538, 0.0
  %v1071 = vadd.f32 %v1069, %v1070
  %v1072 = vrot.slane %v1071, 4
  %v1073 = vadd.f32 %v1071, %v1072
  %v1074 = vrot.slane %v1073, 2
  %v1075 = vadd.f32 %v1073, %v1074
  %v1076 = vrot.slane %v1075, 1
  %v1077 = vadd.f32 %v1075, %v1076
  %v1078 = vsel %vm1050, %v539, 0.0
  %v1079 = vsel %vm1050, %v540, 0.0
  %v1080 = vadd.f32 %v1078, %v1079
  %v1081 = vrot.slane %v1080, 4
  %v1082 = vadd.f32 %v1080, %v1081
  %v1083 = vrot.slane %v1082, 2
  %v1084 = vadd.f32 %v1082, %v1083
  %v1085 = vrot.slane %v1084, 1
  %v1086 = vadd.f32 %v1084, %v1085
  %v1087 = vsel %vm1050, %v541, 0.0
  %v1088 = vsel %vm1050, %v542, 0.0
  %v1089 = vadd.f32 %v1087, %v1088
  %v1090 = vrot.slane %v1089, 4
  %v1091 = vadd.f32 %v1089, %v1090
  %v1092 = vrot.slane %v1091, 2
  %v1093 = vadd.f32 %v1091, %v1092
  %v1094 = vrot.slane %v1093, 1
  %v1095 = vadd.f32 %v1093, %v1094
  %v1096 = vsel %vm1050, %v543, 0.0
  %v1097 = vsel %vm1050, %v544, 0.0
  %v1098 = vadd.f32 %v1096, %v1097
  %v1099 = vrot.slane %v1098, 4
  %v1100 = vadd.f32 %v1098, %v1099
  %v1101 = vrot.slane %v1100, 2
  %v1102 = vadd.f32 %v1100, %v1101
  %v1103 = vrot.slane %v1102, 1
  %v1104 = vadd.f32 %v1102, %v1103
  %v1105 = vsel %vm1050, %v545, 0.0
  %v1106 = vsel %vm1050, %v546, 0.0
  %v1107 = vadd.f32 %v1105, %v1106
  %v1108 = vrot.slane %v1107, 4
  %v1109 = vadd.f32 %v1107, %v1108
  %v1110 = vrot.slane %v1109, 2
  %v1111 = vadd.f32 %v1109, %v1110
  %v1112 = vrot.slane %v1111, 1
  %v1113 = vadd.f32 %v1111, %v1112
  %v1114 = vsel %vm1050, %v547, 0.0
  %v1115 = vsel %vm1050, %v548, 0.0
  %v1116 = vadd.f32 %v1114, %v1115
  %v1117 = vrot.slane %v1116, 4
  %v1118 = vadd.f32 %v1116, %v1117
  %v1119 = vrot.slane %v1118, 2
  %v1120 = vadd.f32 %v1118, %v1119
  %v1121 = vrot.slane %v1120, 1
  %v1122 = vadd.f32 %v1120, %v1121
  %v1131 = vsel %vm678, %v1068, %v1059
  %v1132 = vsel %vm680, %v1077, %v1131
  %v1133 = vsel %vm682, %v1086, %v1132
  %v1134 = vsel %vm684, %v1095, %v1133
  %v1135 = vsel %vm686, %v1104, %v1134
  %v1136 = vsel %vm688, %v1113, %v1135
  %v1137 = vsel %vm690, %v1122, %v1136
  %1138 = vrot.lane.b32.xlu0 %v1137, 16
  %v1139 = vpop.permute.xlu0 %1138
  %v1141 = vadd.f32 %v11, %v1139
  %1158 = vrot.lane.b32.xlu0 %v581, 96
  %v1159 = vpop.permute.xlu0 %1158
  %1160 = vrot.lane.b32.xlu0 %v582, 96
  %v1161 = vpop.permute.xlu0 %1160
  %1162 = vrot.lane.b32.xlu0 %v583, 96
  %v1163 = vpop.permute.xlu0 %1162
  %1164 = vrot.lane.b32.xlu0 %v584, 96
  %v1165 = vpop.permute.xlu0 %1164
  %1166 = vrot.lane.b32.xlu0 %v585, 96
  %v1167 = vpop.permute.xlu0 %1166
  %1168 = vrot.lane.b32.xlu0 %v586, 96
  %v1169 = vpop.permute.xlu0 %1168
  %1170 = vrot.lane.b32.xlu0 %v587, 96
  %v1171 = vpop.permute.xlu0 %1170
  %1172 = vrot.lane.b32.xlu0 %v588, 96
  %v1173 = vpop.permute.xlu0 %1172
  %1174 = vrot.lane.b32.xlu0 %v589, 96
  %v1175 = vpop.permute.xlu0 %1174
  %1176 = vrot.lane.b32.xlu0 %v590, 96
  %v1177 = vpop.permute.xlu0 %1176
  %1178 = vrot.lane.b32.xlu0 %v591, 96
  %v1179 = vpop.permute.xlu0 %1178
  %1180 = vrot.lane.b32.xlu0 %v592, 96
  %v1181 = vpop.permute.xlu0 %1180
  %1182 = vrot.lane.b32.xlu0 %v593, 96
  %v1183 = vpop.permute.xlu0 %1182
  %1184 = vrot.lane.b32.xlu0 %v594, 96
  %v1185 = vpop.permute.xlu0 %1184
  %1186 = vrot.lane.b32.xlu0 %v595, 96
  %v1187 = vpop.permute.xlu0 %1186
  %1188 = vrot.lane.b32.xlu0 %v596, 96
  %v1189 = vpop.permute.xlu0 %1188
  %v1206 = vsel %vm41, %v1159, 0.0
  %1207 = vadd.xlane.f32.xlu0 %v1206
  %v1208 = vpop.xlane.xlu0 %1207
  %v1209 = vsel %vm41, %v1161, 0.0
  %1210 = vadd.xlane.f32.xlu0 %v1209
  %v1211 = vpop.xlane.xlu0 %1210
  %v1212 = vsel %vm41, %v1163, 0.0
  %1213 = vadd.xlane.f32.xlu0 %v1212
  %v1214 = vpop.xlane.xlu0 %1213
  %v1215 = vsel %vm41, %v1165, 0.0
  %1216 = vadd.xlane.f32.xlu0 %v1215
  %v1217 = vpop.xlane.xlu0 %1216
  %v1218 = vsel %vm41, %v1167, 0.0
  %1219 = vadd.xlane.f32.xlu0 %v1218
  %v1220 = vpop.xlane.xlu0 %1219
  %v1221 = vsel %vm41, %v1169, 0.0
  %1222 = vadd.xlane.f32.xlu0 %v1221
  %v1223 = vpop.xlane.xlu0 %1222
  %v1224 = vsel %vm41, %v1171, 0.0
  %1225 = vadd.xlane.f32.xlu0 %v1224
  %v1226 = vpop.xlane.xlu0 %1225
  %v1227 = vsel %vm41, %v1173, 0.0
  %1228 = vadd.xlane.f32.xlu0 %v1227
  %v1229 = vpop.xlane.xlu0 %1228
  %v1230 = vsel %vm41, %v1175, 0.0
  %1231 = vadd.xlane.f32.xlu0 %v1230
  %v1232 = vpop.xlane.xlu0 %1231
  %v1233 = vsel %vm41, %v1177, 0.0
  %1234 = vadd.xlane.f32.xlu0 %v1233
  %v1235 = vpop.xlane.xlu0 %1234
  %v1236 = vsel %vm41, %v1179, 0.0
  %1237 = vadd.xlane.f32.xlu0 %v1236
  %v1238 = vpop.xlane.xlu0 %1237
  %v1239 = vsel %vm41, %v1181, 0.0
  %1240 = vadd.xlane.f32.xlu0 %v1239
  %v1241 = vpop.xlane.xlu0 %1240
  %v1242 = vsel %vm41, %v1183, 0.0
  %1243 = vadd.xlane.f32.xlu0 %v1242
  %v1244 = vpop.xlane.xlu0 %1243
  %v1245 = vsel %vm41, %v1185, 0.0
  %1246 = vadd.xlane.f32.xlu0 %v1245
  %v1247 = vpop.xlane.xlu0 %1246
  %v1248 = vsel %vm41, %v1187, 0.0
  %1249 = vadd.xlane.f32.xlu0 %v1248
  %v1250 = vpop.xlane.xlu0 %1249
  %v1251 = vsel %vm41, %v1189, 0.0
  %1252 = vadd.xlane.f32.xlu0 %v1251
  %v1253 = vpop.xlane.xlu0 %1252
  %v1270 = vadd.s32 %v29, 4294967264
  %v1271 = vperm.slane %v1208, %v1270
  %v1272 = vadd.s32 %v29, 4294967256
  %v1273 = vperm.slane %v1211, %v1272
  %vm1274 = vcmask 392512
  %v1275 = vsel %vm1274, %v1273, %v1271
  %v1276 = vperm.slane %v1214, %v1270
  %v1277 = vperm.slane %v1217, %v1272
  %v1278 = vsel %vm1274, %v1277, %v1276
  %v1279 = vperm.slane %v1220, %v1270
  %v1280 = vperm.slane %v1223, %v1272
  %v1281 = vsel %vm1274, %v1280, %v1279
  %v1282 = vperm.slane %v1226, %v1270
  %v1283 = vperm.slane %v1229, %v1272
  %v1284 = vsel %vm1274, %v1283, %v1282
  %v1285 = vperm.slane %v1232, %v1270
  %v1286 = vperm.slane %v1235, %v1272
  %v1287 = vsel %vm1274, %v1286, %v1285
  %v1288 = vperm.slane %v1238, %v1270
  %v1289 = vperm.slane %v1241, %v1272
  %v1290 = vsel %vm1274, %v1289, %v1288
  %v1291 = vperm.slane %v1244, %v1270
  %v1292 = vperm.slane %v1247, %v1272
  %v1293 = vsel %vm1274, %v1292, %v1291
  %v1294 = vperm.slane %v1250, %v1270
  %v1295 = vperm.slane %v1253, %v1272
  %v1296 = vsel %vm1274, %v1295, %v1294
  %v1297 = vsel %vm678, %v1278, %v1275
  %v1298 = vsel %vm680, %v1281, %v1297
  %v1299 = vsel %vm682, %v1284, %v1298
  %v1300 = vsel %vm684, %v1287, %v1299
  %v1301 = vsel %vm686, %v1290, %v1300
  %v1302 = vsel %vm688, %v1293, %v1301
  %v1303 = vsel %vm690, %v1296, %v1302
  %v1305 = vadd.f32 %v1141, %v1303
  %v1306 = vsel %vm39, %v794, -1e+30
  %v1307 = vsel %vm41, %v1306, -inf
  %1308 = vmax.xlane.f32.xlu0 %v1307
  %v1309 = vpop.xlane.xlu0 %1308
  %v1310 = vsub.f32 %v1306, %v1309
  %v1311 = vmul.f32 %v1310, 1.442695
  %v1312 = vpow.pop %v1311
  %v1313 = vmul.f32 %v1312, %v34
  %v1314 = vsel %vm41, %v1313, 0.0
  %1315 = vadd.xlane.f32.xlu0 %v1314
  %v1316 = vpop.xlane.xlu0 %1315
  %v1317 = vrcp.pop %v1316
  %v1318 = vmul.f32 %v1313, %v1317
  %v1319 = vlog2.pop %v1316
  %v1320 = vmul.f32 %v1319, 0.6931472
  %v1321 = vadd.f32 %v1320, %v1309
  %v1322 = vmul.f32 %v794, %v72
  %v1323 = vsel %vm41, %v1322, 0.0
  %1324 = vadd.xlane.f32.xlu0 %v1323
  %v1325 = vpop.xlane.xlu0 %1324
  %v1326 = vsub.f32 %v1321, %v1325
  %v1327 = vand.u32 2147483647, %v1049
  %v1328 = vsub.f32 0.0, %v1327
  %v1329 = vmul.f32 %v1328, 1.442695
  %v1330 = vpow.pop %v1329
  %v1331 = vadd.f32 %v1330, 1.0
  %v1332 = vrcp.pop %v1331
  %vm1333 = vcmp.ge.f32.partialorder %v1049, 0.0
  %v1334 = vmul.f32 %v1330, %v1332
  %v1335 = vsel %vm1333, %v1332, %v1334
  %v1336 = vmax.f32 %v1049, 0.0
  %v1337 = vmul.f32 %v1049, %v72
  %v1338 = vsub.f32 %v1336, %v1337
  %v1339 = vlog2.pop %v1331
  %v1340 = vmul.f32 %v1339, 0.6931472
  %v1341 = vadd.f32 %v1338, %v1340
  %v1342 = vmul.f32 %v1341, %v109
  %1344 = vrot.lane.b32.xlu0 %v1342, 112
  %v1345 = vpop.permute.xlu0 %1344
  %v1347 = vsel %vm41, %v1345, 0.0
  %1348 = vadd.xlane.f32.xlu0 %v1347
  %v1349 = vpop.xlane.xlu0 %1348
  %v1350 = vand.u32 2147483647, %v1305
  %v1351 = vsub.f32 0.0, %v1350
  %v1352 = vmul.f32 %v1351, 1.442695
  %v1353 = vpow.pop %v1352
  %v1354 = vadd.f32 %v1353, 1.0
  %v1355 = vrcp.pop %v1354
  %vm1356 = vcmp.ge.f32.partialorder %v1305, 0.0
  %v1357 = vmul.f32 %v1353, %v1355
  %v1358 = vsel %vm1356, %v1355, %v1357
  %v1359 = vmax.f32 %v1305, 0.0
  %v1360 = vmul.f32 %v1305, %v72
  %v1361 = vsub.f32 %v1359, %v1360
  %v1362 = vlog2.pop %v1354
  %v1363 = vmul.f32 %v1362, 0.6931472
  %v1364 = vadd.f32 %v1361, %v1363
  %v1365 = vmul.f32 %v1364, %v121
  %1367 = vrot.lane.b32.xlu0 %v1365, 96
  %v1368 = vpop.permute.xlu0 %1367
  %v1370 = vsel %vm41, %v1368, 0.0
  %1371 = vadd.xlane.f32.xlu0 %v1370
  %v1372 = vpop.xlane.xlu0 %1371
  %v1373 = vadd.f32 %v78, %v1326
  %v1374 = vmul.f32 %v1373, 0.5
  %v1375 = vadd.f32 %v118, %v1349
  %v1376 = vmul.f32 %v1375, 0.03125
  %v1377 = vadd.f32 %v1374, %v1376
  %v1378 = vadd.f32 %v130, %v1372
  %v1379 = vmul.f32 %v1378, 0.041666668
  %v1380 = vadd.f32 %v1377, %v1379
  %v1381 = vsel %vm41, %v1318, %v1335
  %vm1382 = vcmask 261120
  %v1383 = vsel %vm1382, %v1381, %v1358
  %vm1384 = vcmask 392192
  %v1385 = vsel %vm1384, %v1383, %v1380
  %1386 = vst [vmem:[%s2] sm:$0xff] %v1385
  // Predicated region
  $region10: #{_async_tf_criterion_impl.1} parent=0 // pred_check
    _
  $region11: #{_async_tf_criterion_impl.1} parent=0 // pred_check_branch
    %1388 = sbr.rel (0) target = $region13
  $region12: #{_async_tf_criterion_impl.1} parent=0 // pred_region
    _
  $region13: #{_async_tf_criterion_impl.1} parent=0 // pred_fallthru
    _
  // Predicated region
  $region14: #{_async_tf_criterion_impl.1} parent=0 // pred_check
    _
  $region15: #{_async_tf_criterion_impl.1} parent=0 // pred_check_branch
    %1390 = sbr.rel (0) target = $region17
  $region16: #{_async_tf_criterion_impl.1} parent=0 // pred_region
    _
  $region17: #{_async_tf_criterion_impl.1} parent=0 // pred_fallthru
    _

</llo_original>
